<compile_context>
chip_gen: v7x
topology: tpu7x:2x2x1
jax: 0.10.0
libtpu: 0.0.40
codegen_flags: <defaults>
</compile_context>

<pallas_src>
import functools

import jax
import jax.numpy as jnp
from jax import lax
from jax.experimental import pallas as pl
from jax.experimental.pallas import tpu as pltpu


# ---------------------------------------------------------------------------
# Fused kernel: graph build -> 3x ChebConv(K=3)+ReLU -> global attention pool
# ---------------------------------------------------------------------------
def gcn_fused_kernel(x_ref, w_ref, b_ref, gw1_ref, gb1_ref, gw2_ref,
                     out_ref, *, batch_size, wide_k):
    n = x_ref.shape[0]
    bsz = batch_size

    x = x_ref[...]                                                   # (N, F) f32

    # ---- (a) distance-threshold graph -> scaled Cheb Laplacian L_hat -------
    gram = lax.dot_general(x, x, (((1,), (1,)), ((), ())),
                           preferred_element_type=jnp.float32)       # (N, N)
    l2 = jnp.sum(x * x, axis=1, keepdims=True)                       # (N, 1)
    # squared distances, clamped: avoids sqrt(tiny negative) -> NaN of the
    # reference; threshold dist < 0.5*max(dist) == dist2 < 0.25*max(dist2).
    dist2 = jnp.maximum(l2 + jnp.transpose(l2) - 2.0 * gram, 0.0)    # (N, N)
    thres2 = 0.25 * jnp.max(dist2)
    adj = (dist2 < thres2).astype(jnp.float32)

    # batch[i] = i % B (matches the reference's batch vector exactly).
    # Thin (N,1)/(1,N) iotas + broadcast compare -> no (N,N) int32 temporaries.
    bid_row = lax.broadcasted_iota(jnp.int32, (n, 1), 0) % bsz       # (N, 1)
    bid_col = lax.broadcasted_iota(jnp.int32, (1, n), 1) % bsz       # (1, N)
    # reference zeroes entries whose endpoints share a batch id; this also
    # removes the diagonal.
    adj = jnp.where(bid_row == bid_col, 0.0, adj)

    # ChebConv sym normalization with lambda_max = 2:
    #   L_hat = 2/lambda_max * (I - D^-1/2 A D^-1/2) - I = -D^-1/2 A D^-1/2
    deg = jnp.sum(adj, axis=1, keepdims=True)
    dinv = jnp.where(deg > 0.0, lax.rsqrt(deg), 0.0)
    lhat_b = (-(dinv * adj * jnp.transpose(dinv))).astype(jnp.bfloat16)

    # L_hat^2 once: per-layer t1 / t2 matmuls become independent (no L@(L@h)
    # serial chain through the MXU result FIFO).
    l2hat_b = jnp.dot(lhat_b, lhat_b,
                      preferred_element_type=jnp.float32).astype(jnp.bfloat16)

    # ---- (b) three ChebConv(K=3) + ReLU, L_hat and h resident in VMEM ------
    h = x
    for layer in range(3):
        t0 = h
        t0_b = t0.astype(jnp.bfloat16)
        t1 = jnp.dot(lhat_b, t0_b, preferred_element_type=jnp.float32)
        t2 = 2.0 * jnp.dot(l2hat_b, t0_b,
                           preferred_element_type=jnp.float32) - t0
        if wide_k:
            # N >= 128: one K=3F matmul amortizes MXU push overhead.
            cat = jnp.concatenate([t0, t1, t2], axis=1).astype(jnp.bfloat16)
            out = jnp.dot(cat, w_ref[layer],
                          preferred_element_type=jnp.float32)
        else:
            # small N: skip the (N,3F) concat copy, accumulate three dots.
            out = (jnp.dot(t0_b, w_ref[layer, 0],
                           preferred_element_type=jnp.float32)
                   + jnp.dot(t1.astype(jnp.bfloat16), w_ref[layer, 1],
                             preferred_element_type=jnp.float32)
                   + jnp.dot(t2.astype(jnp.bfloat16), w_ref[layer, 2],
                             preferred_element_type=jnp.float32))
        h = jnp.maximum(out + b_ref[layer], 0.0)                     # ReLU

    # ---- (c) global attention pooling ---------------------------------------
    h_b = h.astype(jnp.bfloat16)
    hg = jnp.tanh(jnp.dot(h_b, gw1_ref[...],
                          preferred_element_type=jnp.float32) + gb1_ref[...])
    # second Linear has out dim 1 -> multiply-reduce instead of skinny matmul.
    # Its bias is dropped: softmax is shift-invariant, alpha is unchanged.
    gate = jnp.sum(hg * gw2_ref[...], axis=1, keepdims=True)         # (N, 1)
    g = jnp.transpose(gate)                                          # (1, N)

    mrow = lax.broadcasted_iota(jnp.int32, (bsz, 1), 0)              # (B, 1)
    member = mrow == bid_col                                         # (B, N)

    masked = jnp.where(member, g, -jnp.inf)
    seg_max = jnp.max(masked, axis=1, keepdims=True)                 # (B, 1)
    e = jnp.where(member, jnp.exp(g - seg_max), 0.0)                 # (B, N)
    seg_sum = jnp.sum(e, axis=1, keepdims=True) + 1e-16              # PyG +1e-16
    alpha = e / seg_sum                                              # exact divide
    out_ref[...] = jnp.dot(alpha.astype(jnp.bfloat16), h_b,
                           preferred_element_type=jnp.float32)       # (B, F)


def _cost_estimate(n, f, a, b):
    flops = (
        2 * n * n * f                               # gram
        + 2 * n * n * n                             # L_hat @ L_hat precompute
        + 3 * (4 * n * n * f + 6 * n * f * f)       # 3x (2 graph matmuls + K=3F)
        + 2 * n * f * a                             # gate Linear1
        + 2 * b * n * f                             # weighted pooling
    )
    transcendentals = n * a + b * n + n             # tanh, exp, rsqrt
    bytes_accessed = (
        4 * n * f                                   # x
        + 2 * 3 * 3 * f * f + 4 * 3 * f             # conv weights (bf16) + biases
        + 2 * f * a + 4 * a + 4 * a                 # gate params
        + 4 * b * f                                 # output
    )
    return pl.CostEstimate(flops=flops, transcendentals=transcendentals,
                           bytes_accessed=bytes_accessed)


def _vmem_limit_bytes(n, f, a):
    nn = n * n
    est = (
        4 * n * f                                   # x f32
        + 2 * 9 * f * f + 4 * 3 * f                 # conv weights/biases
        + 2 * f * a + 8 * a                         # gate params
        + 4 * 3 * nn                                # gram / dist2 / adj (f32, live)
        + 2 * 2 * nn                                # lhat + lhat^2 (bf16)
        + 4 * 6 * n * f                             # per-layer t0/t1/t2/out (+bf16)
        + 4 * (n + 2 * n * a)                       # gate activations
    )
    # 2x head-room for double-buffered DMA + compiler scratch; floor at the
    # v6e scoped default, cap at v7x's 64 MiB physical per-TensorCore VMEM.
    return int(min(64 << 20, max(32 << 20, 2 * est)))


# ---------------------------------------------------------------------------
# Wrapper: pack params and launch the single fused pallas_call
# ---------------------------------------------------------------------------
def gcn_pooling_forward(params, feats):
    bsz, bag, f = feats.shape
    n = bsz * bag
    a = params["gate_w1"].shape[1]
    x = feats.reshape(n, f).astype(jnp.float32)

    # For N >= 128 the three Chebyshev weights are concatenated on the
    # contraction axis so [T0|T1|T2] feeds one K=3F MXU matmul; for small N
    # they stay separate (three accumulating dots, no (N,3F) concat copy).
    wide_k = n >= 128
    if wide_k:
        w_all = jnp.stack(
            [jnp.concatenate(params[f"conv{l}_w"], axis=0) for l in (1, 2, 3)]
        ).astype(jnp.bfloat16)                                     # (3, 3F, F)
    else:
        w_all = jnp.stack(
            [jnp.stack(params[f"conv{l}_w"]) for l in (1, 2, 3)]
        ).astype(jnp.bfloat16)                                     # (3, 3, F, F)
    b_all = jnp.stack(
        [params[f"conv{l}_b"].reshape(1, f) for l in (1, 2, 3)]
    ).astype(jnp.float32)                                          # (3, 1, F)

    gw1 = params["gate_w1"].astype(jnp.bfloat16)                   # (F, A)
    gb1 = params["gate_b1"].reshape(1, a).astype(jnp.float32)      # (1, A)
    gw2 = params["gate_w2"].reshape(1, a).astype(jnp.float32)      # (1, A)
    # gate_b2 is intentionally NOT passed: a scalar bias on every gate cannot
    # change the per-batch softmax weights.

    vmem = pl.BlockSpec(memory_space=pltpu.MemorySpace.VMEM)

    return pl.pallas_call(
        functools.partial(gcn_fused_kernel, batch_size=bsz, wide_k=wide_k),
        out_shape=jax.ShapeDtypeStruct((bsz, f), jnp.float32),
        in_specs=[vmem, vmem, vmem, vmem, vmem, vmem],
        out_specs=vmem,
        compiler_params=pltpu.CompilerParams(
            vmem_limit_bytes=_vmem_limit_bytes(n, f, a)),
        cost_estimate=_cost_estimate(n, f, a, bsz),
    )(x, w_all, b_all, gw1, gb1, gw2)


# ---------------------------------------------------------------------------
# Parameter init (deterministic, synthetic)
# ---------------------------------------------------------------------------
def init_params(key, in_feat, attention_feat):
    ks = jax.random.split(key, 12)

    def w(k, fan_in, shape):
        return jax.random.normal(k, shape, jnp.float32) / jnp.sqrt(
            jnp.float32(fan_in))

    p = {}
    idx = 0
    for layer in (1, 2, 3):
        # ChebConv(in_feat, in_feat, K=3): 3 weight matrices + 1 bias
        p[f"conv{layer}_w"] = tuple(
            w(ks[idx + j], in_feat, (in_feat, in_feat)) for j in range(3))
        idx += 3
        p[f"conv{layer}_b"] = jnp.full((in_feat,), 0.01, jnp.float32)
    p["gate_w1"] = w(ks[idx], in_feat, (in_feat, attention_feat)); idx += 1
    p["gate_b1"] = jnp.zeros((attention_feat,), jnp.float32)
    p["gate_w2"] = w(ks[idx], attention_feat, (attention_feat, 1)); idx += 1
    # present in the module (nn.Linear bias) but unused by the kernel: a
    # scalar gate bias is a no-op under the per-batch softmax.
    p["gate_b2"] = jnp.zeros((1,), jnp.float32)
    return p


if __name__ == "__main__":
    batch_size, bag_size, in_feat, attention_feat = 2, 8, 256, 128
    key = jax.random.PRNGKey(0)
    k_x, k_p = jax.random.split(key)
    feats = jax.random.normal(k_x, (batch_size, bag_size, in_feat), jnp.float32)
    params = init_params(k_p, in_feat, attention_feat)

    out = jax.jit(gcn_pooling_forward)(params, feats)
    out = jax.block_until_ready(out)

    assert out.shape == (batch_size, in_feat), out.shape
    assert bool(jnp.isfinite(out).all())
    print("KERNEL_OK")
</pallas_src>

<mosaic_0001>
module attributes {stable_mosaic.version = 11 : i64} {
  func.func @gcn_fused_kernel(%arg0: memref<16x256xf32, #tpu.memory_space<vmem>>, %arg1: memref<3x3x256x256xbf16, #tpu.memory_space<vmem>>, %arg2: memref<3x1x256xf32, #tpu.memory_space<vmem>>, %arg3: memref<256x128xbf16, #tpu.memory_space<vmem>>, %arg4: memref<1x128xf32, #tpu.memory_space<vmem>>, %arg5: memref<1x128xf32, #tpu.memory_space<vmem>>, %arg6: memref<2x256xf32, #tpu.memory_space<vmem>>) attributes {dimension_semantics = [], scalar_prefetch = 0 : i64, scratch_operands = 0 : i64, tpu.core_type = #tpu.core_type<tc>} {
    %c0 = arith.constant 0 : index
    %c0_0 = arith.constant 0 : index
    %0 = vector.load %arg0[%c0, %c0_0] : memref<16x256xf32, #tpu.memory_space<vmem>>, vector<16x256xf32>
    %cst = arith.constant dense<0.000000e+00> : vector<16x16xf32>
    %1 = tpu.matmul %0, %0, %cst {dimension_numbers = #tpu.dot_dimension_numbers<[1], [1], [0], [0], [0, 0, 1, 0], [], []>} : vector<16x256xf32>, vector<16x256xf32>, vector<16x16xf32> -> vector<16x16xf32>
    %2 = arith.mulf %0, %0 : vector<16x256xf32>
    %cst_1 = arith.constant dense<0.000000e+00> : vector<16xf32>
    %3 = vector.multi_reduction <add>, %2, %cst_1 [1] : vector<16x256xf32> to vector<16xf32>
    %4 = vector.shape_cast %3 : vector<16xf32> to vector<16x1xf32>
    %5 = tpu.transpose %4, [1, 0] : vector<16x1xf32> -> vector<1x16xf32>
    %6 = vector.broadcast %4 : vector<16x1xf32> to vector<16x16xf32>
    %7 = vector.broadcast %5 : vector<1x16xf32> to vector<16x16xf32>
    %8 = arith.addf %6, %7 : vector<16x16xf32>
    %cst_2 = arith.constant 2.000000e+00 : f32
    %9 = vector.broadcast %cst_2 : f32 to vector<16x16xf32>
    %10 = arith.mulf %9, %1 : vector<16x16xf32>
    %11 = arith.subf %8, %10 : vector<16x16xf32>
    %cst_3 = arith.constant 0.000000e+00 : f32
    %12 = vector.broadcast %cst_3 : f32 to vector<16x16xf32>
    %13 = arith.maximumf %11, %12 : vector<16x16xf32>
    %14 = vector.shape_cast %13 : vector<16x16xf32> to vector<1x16x16xf32>
    %cst_4 = arith.constant dense<0xFF800000> : vector<1xf32>
    %15 = vector.multi_reduction <maximumf>, %14, %cst_4 [1, 2] : vector<1x16x16xf32> to vector<1xf32>
    %16 = vector.shape_cast %15 : vector<1xf32> to vector<1x1x1xf32>
    %17 = vector.extract %16[0, 0, 0] : f32 from vector<1x1x1xf32>
    %cst_5 = arith.constant 2.500000e-01 : f32
    %18 = arith.mulf %cst_5, %17 : f32
    %19 = vector.broadcast %18 : f32 to vector<16x16xf32>
    %20 = arith.cmpf olt, %13, %19 : vector<16x16xf32>
    %21 = arith.extui %20 : vector<16x16xi1> to vector<16x16xi32>
    %22 = arith.sitofp %21 : vector<16x16xi32> to vector<16x16xf32>
    %23 = tpu.iota {dimensions = array<i32: 0>} : vector<16x1xi32>
    %c2_i32 = arith.constant 2 : i32
    %c0_i32 = arith.constant 0 : i32
    %24 = arith.cmpi eq, %c2_i32, %c0_i32 : i32
    %c1_i32 = arith.constant 1 : i32
    %25 = arith.select %24, %c1_i32, %c2_i32 : i32
    %26 = vector.broadcast %25 : i32 to vector<16x1xi32>
    %27 = arith.remsi %23, %26 : vector<16x1xi32>
    %c0_i32_6 = arith.constant 0 : i32
    %28 = vector.broadcast %c0_i32_6 : i32 to vector<16x1xi32>
    %29 = arith.cmpi ne, %27, %28 : vector<16x1xi32>
    %c0_i32_7 = arith.constant 0 : i32
    %30 = vector.broadcast %c0_i32_7 : i32 to vector<16x1xi32>
    %31 = arith.cmpi slt, %27, %30 : vector<16x1xi32>
    %c0_i32_8 = arith.constant 0 : i32
    %32 = arith.cmpi slt, %25, %c0_i32_8 : i32
    %33 = vector.broadcast %32 : i1 to vector<16x1xi1>
    %34 = vector.broadcast %33 : vector<16x1xi1> to vector<16x1xi1>
    %35 = arith.xori %31, %34 : vector<16x1xi1>
    %36 = arith.andi %35, %29 : vector<16x1xi1>
    %37 = vector.broadcast %25 : i32 to vector<16x1xi32>
    %38 = arith.addi %27, %37 : vector<16x1xi32>
    %39 = arith.select %36, %38, %27 : vector<16x1xi1>, vector<16x1xi32>
    %40 = tpu.iota {dimensions = array<i32: 1>} : vector<1x16xi32>
    %c2_i32_9 = arith.constant 2 : i32
    %c0_i32_10 = arith.constant 0 : i32
    %41 = arith.cmpi eq, %c2_i32_9, %c0_i32_10 : i32
    %c1_i32_11 = arith.constant 1 : i32
    %42 = arith.select %41, %c1_i32_11, %c2_i32_9 : i32
    %43 = vector.broadcast %42 : i32 to vector<1x16xi32>
    %44 = arith.remsi %40, %43 : vector<1x16xi32>
    %c0_i32_12 = arith.constant 0 : i32
    %45 = vector.broadcast %c0_i32_12 : i32 to vector<1x16xi32>
    %46 = arith.cmpi ne, %44, %45 : vector<1x16xi32>
    %c0_i32_13 = arith.constant 0 : i32
    %47 = vector.broadcast %c0_i32_13 : i32 to vector<1x16xi32>
    %48 = arith.cmpi slt, %44, %47 : vector<1x16xi32>
    %c0_i32_14 = arith.constant 0 : i32
    %49 = arith.cmpi slt, %42, %c0_i32_14 : i32
    %50 = vector.broadcast %49 : i1 to vector<1x16xi1>
    %51 = vector.broadcast %50 : vector<1x16xi1> to vector<1x16xi1>
    %52 = arith.xori %48, %51 : vector<1x16xi1>
    %53 = arith.andi %52, %46 : vector<1x16xi1>
    %54 = vector.broadcast %42 : i32 to vector<1x16xi32>
    %55 = arith.addi %44, %54 : vector<1x16xi32>
    %56 = arith.select %53, %55, %44 : vector<1x16xi1>, vector<1x16xi32>
    %57 = vector.broadcast %39 : vector<16x1xi32> to vector<16x16xi32>
    %58 = vector.broadcast %56 : vector<1x16xi32> to vector<16x16xi32>
    %59 = arith.cmpi eq, %57, %58 : vector<16x16xi32>
    %cst_15 = arith.constant 0.000000e+00 : f32
    %60 = vector.broadcast %cst_15 : f32 to vector<16x16xf32>
    %61 = arith.select %59, %60, %22 : vector<16x16xi1>, vector<16x16xf32>
    %cst_16 = arith.constant dense<0.000000e+00> : vector<16xf32>
    %62 = vector.multi_reduction <add>, %61, %cst_16 [1] : vector<16x16xf32> to vector<16xf32>
    %63 = vector.shape_cast %62 : vector<16xf32> to vector<16x1xf32>
    %cst_17 = arith.constant 0.000000e+00 : f32
    %64 = vector.broadcast %cst_17 : f32 to vector<16x1xf32>
    %65 = arith.cmpf ogt, %63, %64 : vector<16x1xf32>
    %66 = math.rsqrt %63 : vector<16x1xf32>
    %cst_18 = arith.constant 0.000000e+00 : f32
    %67 = vector.broadcast %cst_18 : f32 to vector<16x1xf32>
    %68 = arith.select %65, %66, %67 : vector<16x1xi1>, vector<16x1xf32>
    %69 = vector.broadcast %68 : vector<16x1xf32> to vector<16x16xf32>
    %70 = arith.mulf %69, %61 : vector<16x16xf32>
    %71 = tpu.transpose %68, [1, 0] : vector<16x1xf32> -> vector<1x16xf32>
    %72 = vector.broadcast %71 : vector<1x16xf32> to vector<16x16xf32>
    %73 = arith.mulf %70, %72 : vector<16x16xf32>
    %cst_19 = arith.constant 0.000000e+00 : f32
    %74 = vector.broadcast %cst_19 : f32 to vector<16x16xf32>
    %75 = arith.subf %74, %73 : vector<16x16xf32>
    %76 = arith.truncf %75 : vector<16x16xf32> to vector<16x16xbf16>
    %cst_20 = arith.constant dense<0.000000e+00> : vector<16x16xf32>
    %77 = tpu.matmul %76, %76, %cst_20 {dimension_numbers = #tpu.dot_dimension_numbers<[1], [0], [0], [1], [0, 0, 1, 1], [], []>} : vector<16x16xbf16>, vector<16x16xbf16>, vector<16x16xf32> -> vector<16x16xf32>
    %78 = arith.truncf %77 : vector<16x16xf32> to vector<16x16xbf16>
    %79 = arith.truncf %0 : vector<16x256xf32> to vector<16x256xbf16>
    %cst_21 = arith.constant dense<0.000000e+00> : vector<16x256xf32>
    %80 = tpu.matmul %76, %79, %cst_21 {dimension_numbers = #tpu.dot_dimension_numbers<[1], [0], [0], [1], [0, 0, 1, 1], [], []>} : vector<16x16xbf16>, vector<16x256xbf16>, vector<16x256xf32> -> vector<16x256xf32>
    %cst_22 = arith.constant dense<0.000000e+00> : vector<16x256xf32>
    %81 = tpu.matmul %78, %79, %cst_22 {dimension_numbers = #tpu.dot_dimension_numbers<[1], [0], [0], [1], [0, 0, 1, 1], [], []>} : vector<16x16xbf16>, vector<16x256xbf16>, vector<16x256xf32> -> vector<16x256xf32>
    %cst_23 = arith.constant 2.000000e+00 : f32
    %82 = vector.broadcast %cst_23 : f32 to vector<16x256xf32>
    %83 = arith.mulf %82, %81 : vector<16x256xf32>
    %84 = arith.subf %83, %0 : vector<16x256xf32>
    %c0_24 = arith.constant 0 : index
    %c0_25 = arith.constant 0 : index
    %c0_26 = arith.constant 0 : index
    %c0_27 = arith.constant 0 : index
    %85 = vector.load %arg1[%c0_24, %c0_25, %c0_26, %c0_27] : memref<3x3x256x256xbf16, #tpu.memory_space<vmem>>, vector<1x1x256x256xbf16>
    %86 = vector.shape_cast %85 : vector<1x1x256x256xbf16> to vector<256x256xbf16>
    %cst_28 = arith.constant dense<0.000000e+00> : vector<16x256xf32>
    %87 = tpu.matmul %79, %86, %cst_28 {dimension_numbers = #tpu.dot_dimension_numbers<[1], [0], [0], [1], [0, 0, 1, 1], [], []>} : vector<16x256xbf16>, vector<256x256xbf16>, vector<16x256xf32> -> vector<16x256xf32>
    %88 = arith.truncf %80 : vector<16x256xf32> to vector<16x256xbf16>
    %c0_29 = arith.constant 0 : index
    %c1 = arith.constant 1 : index
    %c0_30 = arith.constant 0 : index
    %c0_31 = arith.constant 0 : index
    %89 = vector.load %arg1[%c0_29, %c1, %c0_30, %c0_31] : memref<3x3x256x256xbf16, #tpu.memory_space<vmem>>, vector<1x1x256x256xbf16>
    %90 = vector.shape_cast %89 : vector<1x1x256x256xbf16> to vector<256x256xbf16>
    %cst_32 = arith.constant dense<0.000000e+00> : vector<16x256xf32>
    %91 = tpu.matmul %88, %90, %cst_32 {dimension_numbers = #tpu.dot_dimension_numbers<[1], [0], [0], [1], [0, 0, 1, 1], [], []>} : vector<16x256xbf16>, vector<256x256xbf16>, vector<16x256xf32> -> vector<16x256xf32>
    %92 = arith.addf %87, %91 : vector<16x256xf32>
    %93 = arith.truncf %84 : vector<16x256xf32> to vector<16x256xbf16>
    %c0_33 = arith.constant 0 : index
    %c2 = arith.constant 2 : index
    %c0_34 = arith.constant 0 : index
    %c0_35 = arith.constant 0 : index
    %94 = vector.load %arg1[%c0_33, %c2, %c0_34, %c0_35] : memref<3x3x256x256xbf16, #tpu.memory_space<vmem>>, vector<1x1x256x256xbf16>
    %95 = vector.shape_cast %94 : vector<1x1x256x256xbf16> to vector<256x256xbf16>
    %cst_36 = arith.constant dense<0.000000e+00> : vector<16x256xf32>
    %96 = tpu.matmul %93, %95, %cst_36 {dimension_numbers = #tpu.dot_dimension_numbers<[1], [0], [0], [1], [0, 0, 1, 1], [], []>} : vector<16x256xbf16>, vector<256x256xbf16>, vector<16x256xf32> -> vector<16x256xf32>
    %97 = arith.addf %92, %96 : vector<16x256xf32>
    %c0_37 = arith.constant 0 : index
    %c0_38 = arith.constant 0 : index
    %c0_39 = arith.constant 0 : index
    %98 = vector.load %arg2[%c0_37, %c0_38, %c0_39] : memref<3x1x256xf32, #tpu.memory_space<vmem>>, vector<1x1x256xf32>
    %99 = vector.shape_cast %98 : vector<1x1x256xf32> to vector<1x256xf32>
    %100 = vector.broadcast %99 : vector<1x256xf32> to vector<16x256xf32>
    %101 = arith.addf %97, %100 : vector<16x256xf32>
    %cst_40 = arith.constant 0.000000e+00 : f32
    %102 = vector.broadcast %cst_40 : f32 to vector<16x256xf32>
    %103 = arith.maximumf %101, %102 : vector<16x256xf32>
    %104 = arith.truncf %103 : vector<16x256xf32> to vector<16x256xbf16>
    %cst_41 = arith.constant dense<0.000000e+00> : vector<16x256xf32>
    %105 = tpu.matmul %76, %104, %cst_41 {dimension_numbers = #tpu.dot_dimension_numbers<[1], [0], [0], [1], [0, 0, 1, 1], [], []>} : vector<16x16xbf16>, vector<16x256xbf16>, vector<16x256xf32> -> vector<16x256xf32>
    %cst_42 = arith.constant dense<0.000000e+00> : vector<16x256xf32>
    %106 = tpu.matmul %78, %104, %cst_42 {dimension_numbers = #tpu.dot_dimension_numbers<[1], [0], [0], [1], [0, 0, 1, 1], [], []>} : vector<16x16xbf16>, vector<16x256xbf16>, vector<16x256xf32> -> vector<16x256xf32>
    %cst_43 = arith.constant 2.000000e+00 : f32
    %107 = vector.broadcast %cst_43 : f32 to vector<16x256xf32>
    %108 = arith.mulf %107, %106 : vector<16x256xf32>
    %109 = arith.subf %108, %103 : vector<16x256xf32>
    %c1_44 = arith.constant 1 : index
    %c0_45 = arith.constant 0 : index
    %c0_46 = arith.constant 0 : index
    %c0_47 = arith.constant 0 : index
    %110 = vector.load %arg1[%c1_44, %c0_45, %c0_46, %c0_47] : memref<3x3x256x256xbf16, #tpu.memory_space<vmem>>, vector<1x1x256x256xbf16>
    %111 = vector.shape_cast %110 : vector<1x1x256x256xbf16> to vector<256x256xbf16>
    %cst_48 = arith.constant dense<0.000000e+00> : vector<16x256xf32>
    %112 = tpu.matmul %104, %111, %cst_48 {dimension_numbers = #tpu.dot_dimension_numbers<[1], [0], [0], [1], [0, 0, 1, 1], [], []>} : vector<16x256xbf16>, vector<256x256xbf16>, vector<16x256xf32> -> vector<16x256xf32>
    %113 = arith.truncf %105 : vector<16x256xf32> to vector<16x256xbf16>
    %c1_49 = arith.constant 1 : index
    %c1_50 = arith.constant 1 : index
    %c0_51 = arith.constant 0 : index
    %c0_52 = arith.constant 0 : index
    %114 = vector.load %arg1[%c1_49, %c1_50, %c0_51, %c0_52] : memref<3x3x256x256xbf16, #tpu.memory_space<vmem>>, vector<1x1x256x256xbf16>
    %115 = vector.shape_cast %114 : vector<1x1x256x256xbf16> to vector<256x256xbf16>
    %cst_53 = arith.constant dense<0.000000e+00> : vector<16x256xf32>
    %116 = tpu.matmul %113, %115, %cst_53 {dimension_numbers = #tpu.dot_dimension_numbers<[1], [0], [0], [1], [0, 0, 1, 1], [], []>} : vector<16x256xbf16>, vector<256x256xbf16>, vector<16x256xf32> -> vector<16x256xf32>
    %117 = arith.addf %112, %116 : vector<16x256xf32>
    %118 = arith.truncf %109 : vector<16x256xf32> to vector<16x256xbf16>
    %c1_54 = arith.constant 1 : index
    %c2_55 = arith.constant 2 : index
    %c0_56 = arith.constant 0 : index
    %c0_57 = arith.constant 0 : index
    %119 = vector.load %arg1[%c1_54, %c2_55, %c0_56, %c0_57] : memref<3x3x256x256xbf16, #tpu.memory_space<vmem>>, vector<1x1x256x256xbf16>
    %120 = vector.shape_cast %119 : vector<1x1x256x256xbf16> to vector<256x256xbf16>
    %cst_58 = arith.constant dense<0.000000e+00> : vector<16x256xf32>
    %121 = tpu.matmul %118, %120, %cst_58 {dimension_numbers = #tpu.dot_dimension_numbers<[1], [0], [0], [1], [0, 0, 1, 1], [], []>} : vector<16x256xbf16>, vector<256x256xbf16>, vector<16x256xf32> -> vector<16x256xf32>
    %122 = arith.addf %117, %121 : vector<16x256xf32>
    %c1_59 = arith.constant 1 : index
    %c0_60 = arith.constant 0 : index
    %c0_61 = arith.constant 0 : index
    %123 = vector.load %arg2[%c1_59, %c0_60, %c0_61] : memref<3x1x256xf32, #tpu.memory_space<vmem>>, vector<1x1x256xf32>
    %124 = vector.shape_cast %123 : vector<1x1x256xf32> to vector<1x256xf32>
    %125 = vector.broadcast %124 : vector<1x256xf32> to vector<16x256xf32>
    %126 = arith.addf %122, %125 : vector<16x256xf32>
    %cst_62 = arith.constant 0.000000e+00 : f32
    %127 = vector.broadcast %cst_62 : f32 to vector<16x256xf32>
    %128 = arith.maximumf %126, %127 : vector<16x256xf32>
    %129 = arith.truncf %128 : vector<16x256xf32> to vector<16x256xbf16>
    %cst_63 = arith.constant dense<0.000000e+00> : vector<16x256xf32>
    %130 = tpu.matmul %76, %129, %cst_63 {dimension_numbers = #tpu.dot_dimension_numbers<[1], [0], [0], [1], [0, 0, 1, 1], [], []>} : vector<16x16xbf16>, vector<16x256xbf16>, vector<16x256xf32> -> vector<16x256xf32>
    %cst_64 = arith.constant dense<0.000000e+00> : vector<16x256xf32>
    %131 = tpu.matmul %78, %129, %cst_64 {dimension_numbers = #tpu.dot_dimension_numbers<[1], [0], [0], [1], [0, 0, 1, 1], [], []>} : vector<16x16xbf16>, vector<16x256xbf16>, vector<16x256xf32> -> vector<16x256xf32>
    %cst_65 = arith.constant 2.000000e+00 : f32
    %132 = vector.broadcast %cst_65 : f32 to vector<16x256xf32>
    %133 = arith.mulf %132, %131 : vector<16x256xf32>
    %134 = arith.subf %133, %128 : vector<16x256xf32>
    %c2_66 = arith.constant 2 : index
    %c0_67 = arith.constant 0 : index
    %c0_68 = arith.constant 0 : index
    %c0_69 = arith.constant 0 : index
    %135 = vector.load %arg1[%c2_66, %c0_67, %c0_68, %c0_69] : memref<3x3x256x256xbf16, #tpu.memory_space<vmem>>, vector<1x1x256x256xbf16>
    %136 = vector.shape_cast %135 : vector<1x1x256x256xbf16> to vector<256x256xbf16>
    %cst_70 = arith.constant dense<0.000000e+00> : vector<16x256xf32>
    %137 = tpu.matmul %129, %136, %cst_70 {dimension_numbers = #tpu.dot_dimension_numbers<[1], [0], [0], [1], [0, 0, 1, 1], [], []>} : vector<16x256xbf16>, vector<256x256xbf16>, vector<16x256xf32> -> vector<16x256xf32>
    %138 = arith.truncf %130 : vector<16x256xf32> to vector<16x256xbf16>
    %c2_71 = arith.constant 2 : index
    %c1_72 = arith.constant 1 : index
    %c0_73 = arith.constant 0 : index
    %c0_74 = arith.constant 0 : index
    %139 = vector.load %arg1[%c2_71, %c1_72, %c0_73, %c0_74] : memref<3x3x256x256xbf16, #tpu.memory_space<vmem>>, vector<1x1x256x256xbf16>
    %140 = vector.shape_cast %139 : vector<1x1x256x256xbf16> to vector<256x256xbf16>
    %cst_75 = arith.constant dense<0.000000e+00> : vector<16x256xf32>
    %141 = tpu.matmul %138, %140, %cst_75 {dimension_numbers = #tpu.dot_dimension_numbers<[1], [0], [0], [1], [0, 0, 1, 1], [], []>} : vector<16x256xbf16>, vector<256x256xbf16>, vector<16x256xf32> -> vector<16x256xf32>
    %142 = arith.addf %137, %141 : vector<16x256xf32>
    %143 = arith.truncf %134 : vector<16x256xf32> to vector<16x256xbf16>
    %c2_76 = arith.constant 2 : index
    %c2_77 = arith.constant 2 : index
    %c0_78 = arith.constant 0 : index
    %c0_79 = arith.constant 0 : index
    %144 = vector.load %arg1[%c2_76, %c2_77, %c0_78, %c0_79] : memref<3x3x256x256xbf16, #tpu.memory_space<vmem>>, vector<1x1x256x256xbf16>
    %145 = vector.shape_cast %144 : vector<1x1x256x256xbf16> to vector<256x256xbf16>
    %cst_80 = arith.constant dense<0.000000e+00> : vector<16x256xf32>
    %146 = tpu.matmul %143, %145, %cst_80 {dimension_numbers = #tpu.dot_dimension_numbers<[1], [0], [0], [1], [0, 0, 1, 1], [], []>} : vector<16x256xbf16>, vector<256x256xbf16>, vector<16x256xf32> -> vector<16x256xf32>
    %147 = arith.addf %142, %146 : vector<16x256xf32>
    %c2_81 = arith.constant 2 : index
    %c0_82 = arith.constant 0 : index
    %c0_83 = arith.constant 0 : index
    %148 = vector.load %arg2[%c2_81, %c0_82, %c0_83] : memref<3x1x256xf32, #tpu.memory_space<vmem>>, vector<1x1x256xf32>
    %149 = vector.shape_cast %148 : vector<1x1x256xf32> to vector<1x256xf32>
    %150 = vector.broadcast %149 : vector<1x256xf32> to vector<16x256xf32>
    %151 = arith.addf %147, %150 : vector<16x256xf32>
    %cst_84 = arith.constant 0.000000e+00 : f32
    %152 = vector.broadcast %cst_84 : f32 to vector<16x256xf32>
    %153 = arith.maximumf %151, %152 : vector<16x256xf32>
    %154 = arith.truncf %153 : vector<16x256xf32> to vector<16x256xbf16>
    %c0_85 = arith.constant 0 : index
    %c0_86 = arith.constant 0 : index
    %155 = vector.load %arg3[%c0_85, %c0_86] : memref<256x128xbf16, #tpu.memory_space<vmem>>, vector<256x128xbf16>
    %cst_87 = arith.constant dense<0.000000e+00> : vector<16x128xf32>
    %156 = tpu.matmul %154, %155, %cst_87 {dimension_numbers = #tpu.dot_dimension_numbers<[1], [0], [0], [1], [0, 0, 1, 1], [], []>} : vector<16x256xbf16>, vector<256x128xbf16>, vector<16x128xf32> -> vector<16x128xf32>
    %c0_88 = arith.constant 0 : index
    %c0_89 = arith.constant 0 : index
    %157 = vector.load %arg4[%c0_88, %c0_89] : memref<1x128xf32, #tpu.memory_space<vmem>>, vector<1x128xf32>
    %158 = vector.broadcast %157 : vector<1x128xf32> to vector<16x128xf32>
    %159 = arith.addf %156, %158 : vector<16x128xf32>
    %160 = math.tanh %159 : vector<16x128xf32>
    %c0_90 = arith.constant 0 : index
    %c0_91 = arith.constant 0 : index
    %161 = vector.load %arg5[%c0_90, %c0_91] : memref<1x128xf32, #tpu.memory_space<vmem>>, vector<1x128xf32>
    %162 = vector.broadcast %161 : vector<1x128xf32> to vector<16x128xf32>
    %163 = arith.mulf %160, %162 : vector<16x128xf32>
    %cst_92 = arith.constant dense<0.000000e+00> : vector<16xf32>
    %164 = vector.multi_reduction <add>, %163, %cst_92 [1] : vector<16x128xf32> to vector<16xf32>
    %165 = vector.shape_cast %164 : vector<16xf32> to vector<16x1xf32>
    %166 = tpu.transpose %165, [1, 0] : vector<16x1xf32> -> vector<1x16xf32>
    %167 = tpu.iota {dimensions = array<i32: 0>} : vector<2x1xi32>
    %168 = vector.broadcast %167 : vector<2x1xi32> to vector<2x16xi32>
    %169 = vector.broadcast %56 : vector<1x16xi32> to vector<2x16xi32>
    %170 = arith.cmpi eq, %168, %169 : vector<2x16xi32>
    %cst_93 = arith.constant 0xFF800000 : f32
    %171 = vector.shape_cast %166 : vector<1x16xf32> to vector<1x16xf32>
    %172 = vector.broadcast %171 : vector<1x16xf32> to vector<2x16xf32>
    %173 = vector.broadcast %cst_93 : f32 to vector<2x16xf32>
    %174 = arith.select %170, %172, %173 : vector<2x16xi1>, vector<2x16xf32>
    %cst_94 = arith.constant dense<0xFF800000> : vector<2xf32>
    %175 = vector.multi_reduction <maximumf>, %174, %cst_94 [1] : vector<2x16xf32> to vector<2xf32>
    %176 = vector.shape_cast %175 : vector<2xf32> to vector<2x1xf32>
    %177 = vector.broadcast %166 : vector<1x16xf32> to vector<2x16xf32>
    %178 = vector.broadcast %176 : vector<2x1xf32> to vector<2x16xf32>
    %179 = arith.subf %177, %178 : vector<2x16xf32>
    %180 = math.exp %179 : vector<2x16xf32>
    %cst_95 = arith.constant 0.000000e+00 : f32
    %181 = vector.broadcast %cst_95 : f32 to vector<2x16xf32>
    %182 = arith.select %170, %180, %181 : vector<2x16xi1>, vector<2x16xf32>
    %cst_96 = arith.constant dense<0.000000e+00> : vector<2xf32>
    %183 = vector.multi_reduction <add>, %182, %cst_96 [1] : vector<2x16xf32> to vector<2xf32>
    %184 = vector.shape_cast %183 : vector<2xf32> to vector<2x1xf32>
    %cst_97 = arith.constant 1.000000e-16 : f32
    %185 = vector.broadcast %cst_97 : f32 to vector<2x1xf32>
    %186 = arith.addf %184, %185 : vector<2x1xf32>
    %187 = vector.broadcast %186 : vector<2x1xf32> to vector<2x16xf32>
    %188 = arith.divf %182, %187 : vector<2x16xf32>
    %189 = arith.truncf %188 : vector<2x16xf32> to vector<2x16xbf16>
    %cst_98 = arith.constant dense<0.000000e+00> : vector<2x256xf32>
    %190 = tpu.matmul %189, %154, %cst_98 {dimension_numbers = #tpu.dot_dimension_numbers<[1], [0], [0], [1], [0, 0, 1, 1], [], []>} : vector<2x16xbf16>, vector<16x256xbf16>, vector<2x256xf32> -> vector<2x256xf32>
    %c0_99 = arith.constant 0 : index
    %c0_100 = arith.constant 0 : index
    %191 = vector.load %arg6[%c0_99, %c0_100] : memref<2x256xf32, #tpu.memory_space<vmem>>, vector<2x256xf32>
    tpu.vector_store %arg6[%c0_99, %c0_100], %190 {strides = array<i32>} : memref<2x256xf32, #tpu.memory_space<vmem>>, vector<2x256xf32>,
    return
  }
}

</mosaic_0001>

<llo_original>
// kernel: gcn_pooling_forward.1
$region0: #{gcn_pooling_forward.1}
  #allocation0 [shape = 'u32[]', space=smem, size = 0x4, offset = 0x4, fixed_abs, tag = 'smem constant byte address 0x4 - core index']
  #allocation1 [shape = 'u32[144,128]{1,0:T(1,128)}', space=vmem, size = 0x12000, scoped, tag = 'internal scratch']
  %s0 = inlined_call_operand.vmem [shape: f32[16,256], index: 0, kind: input, shape index: {}]
  %s1 = inlined_call_operand.vmem [shape: bf16[3,3,256,256], index: 1, kind: input, shape index: {}]
  %s2 = inlined_call_operand.vmem [shape: f32[3,1,256], index: 2, kind: input, shape index: {}]
  %s3 = inlined_call_operand.vmem [shape: bf16[256,128], index: 3, kind: input, shape index: {}]
  %s4 = inlined_call_operand.vmem [shape: f32[1,128], index: 4, kind: input, shape index: {}]
  %s5 = inlined_call_operand.vmem [shape: f32[1,128], index: 5, kind: input, shape index: {}]
  %s6 = inlined_call_operand.hbm [shape: f32[2,256], index: 6, kind: output, shape index: {}]
  %s7 = sld [smem:[#allocation0]]
  $region34: #{gcn_pooling_forward.1} parent=0
    _
  %s9 = ssub.s32 1, %s7
  %s10 = scalar_select 0, %s9, %s7
  $region1: #{gcn_pooling_forward.1} parent=0
    #allocation2 [shape = 'u8[2048]{0}', space=vmem, size = 0x800, scoped, tag = 'output window, operand 0, single buffered']
    #allocation3 [shape = 's32[1]{0}', space=sflag, size = 0x4, scoped, tag = 'scoped memory for gcn_pooling_forward.1']
    %11 = vsyncpa [#allocation3], 0
    // Predicated region
    $region2: #{gcn_pooling_forward.1} parent=1 // pred_check
      _
    $region3: #{gcn_pooling_forward.1} parent=1 // pred_check_branch
      %13 = sbr.rel (0) target = $region5
    $region4: #{gcn_pooling_forward.1} parent=1 // pred_region
      _
    $region5: #{gcn_pooling_forward.1} parent=1 // pred_fallthru
      _
    // Predicated region
    $region6: #{gcn_pooling_forward.1} parent=1 // pred_check
      _
    $region7: #{gcn_pooling_forward.1} parent=1 // pred_check_branch
      %15 = sbr.rel (0) target = $region9
    $region8: #{gcn_pooling_forward.1} parent=1 // pred_region
      _
    $region9: #{gcn_pooling_forward.1} parent=1 // pred_fallthru
      _
    // Predicated region
    $region10: #{gcn_pooling_forward.1} parent=1 // pred_check
      _
    $region11: #{gcn_pooling_forward.1} parent=1 // pred_check_branch
      %17 = sbr.rel (0) target = $region13
    $region12: #{gcn_pooling_forward.1} parent=1 // pred_region
      _
    $region13: #{gcn_pooling_forward.1} parent=1 // pred_fallthru
      _
    // Predicated region
    $region14: #{gcn_pooling_forward.1} parent=1 // pred_check
      _
    $region15: #{gcn_pooling_forward.1} parent=1 // pred_check_branch
      %19 = sbr.rel (0) target = $region17
    $region16: #{gcn_pooling_forward.1} parent=1 // pred_region
      _
    $region17: #{gcn_pooling_forward.1} parent=1 // pred_fallthru
      _
    // Predicated region
    $region18: #{gcn_pooling_forward.1} parent=1 // pred_check
      _
    $region19: #{gcn_pooling_forward.1} parent=1 // pred_check_branch
      %21 = sbr.rel (0) target = $region21
    $region20: #{gcn_pooling_forward.1} parent=1 // pred_region
      _
    $region21: #{gcn_pooling_forward.1} parent=1 // pred_fallthru
      _
    // Predicated region
    $region22: #{gcn_pooling_forward.1} parent=1 // pred_check
      _
    $region23: #{gcn_pooling_forward.1} parent=1 // pred_check_branch
      %23 = sbr.rel (0) target = $region25
    $region24: #{gcn_pooling_forward.1} parent=1 // pred_region
      _
    $region25: #{gcn_pooling_forward.1} parent=1 // pred_fallthru
      _
    %v25 = vld [vmem:[%s0] sm:$0xff]
    %v26 = vld [vmem:[%s0 + $0x8] sm:$0xff]
    %v27 = vld [vmem:[%s0 + $0x10] sm:$0xff]
    %v28 = vld [vmem:[%s0 + $0x18] sm:$0xff]
    %29 = vmatprep.subr.mxu0 %v26
    %30 = vmatpush1.xpose.msra.mxu0 %v25
    %31 = vmatprep.subr.mxu0 %v28
    %32 = vmatpush1.xpose.msra.mxu0 %v27
    %33 = vmatprep.subr.mxu0 0.0
    %34 = vmatpush1.xpose.msra.mxu0 0.0
    %35 = vmatprep.subr.mxu0 0.0
    %36 = vmatpush1.xpose.msra.mxu0 0.0
    %37 = vmatprep.subr.mxu0 0.0
    %38 = vmatpush1.xpose.msra.mxu0 0.0
    %39 = vmatprep.subr.mxu0 0.0
    %40 = vmatpush1.xpose.msra.mxu0 0.0
    %41 = vmatprep.subr.mxu0 0.0
    %42 = vmatpush1.xpose.msra.mxu0 0.0
    %43 = vmatprep.subr.mxu0 0.0
    %44 = vmatpush1.xpose.msra.mxu0 0.0
    %45 = vmatprep.subr.mxu0 0.0
    %46 = vmatpush1.xpose.msra.mxu0 0.0
    %47 = vmatprep.subr.mxu0 0.0
    %48 = vmatpush1.xpose.msra.mxu0 0.0
    %49 = vmatprep.subr.mxu0 0.0
    %50 = vmatpush1.xpose.msra.mxu0 0.0
    %51 = vmatprep.subr.mxu0 0.0
    %52 = vmatpush1.xpose.msra.mxu0 0.0
    %53 = vmatprep.subr.mxu0 0.0
    %54 = vmatpush1.xpose.msra.mxu0 0.0
    %55 = vmatprep.subr.mxu0 0.0
    %56 = vmatpush1.xpose.msra.mxu0 0.0
    %57 = vmatprep.subr.mxu0 0.0
    %58 = vmatpush1.xpose.msra.mxu0 0.0
    %59 = vmatprep.subr.mxu0 0.0
    %60 = vmatpush1.xpose.msra.mxu0 0.0
    %61 = vmatprep.subr.mxu0 0.0
    %62 = vmatpush1.xpose.msra.mxu0 0.0
    %63 = vmatprep.subr.mxu0 0.0
    %64 = vmatpush1.xpose.msra.mxu0 0.0
    %65 = vmatprep.subr.mxu0 0.0
    %66 = vmatpush1.xpose.msra.mxu0 0.0
    %67 = vmatprep.subr.mxu0 0.0
    %68 = vmatpush1.xpose.msra.mxu0 0.0
    %69 = vmatprep.subr.mxu0 0.0
    %70 = vmatpush1.xpose.msra.mxu0 0.0
    %71 = vmatprep.subr.mxu0 0.0
    %72 = vmatpush1.xpose.msra.mxu0 0.0
    %73 = vmatprep.subr.mxu0 0.0
    %74 = vmatpush1.xpose.msra.mxu0 0.0
    %75 = vmatprep.subr.mxu0 0.0
    %76 = vmatpush1.xpose.msra.mxu0 0.0
    %77 = vmatprep.subr.mxu0 0.0
    %78 = vmatpush1.xpose.msra.mxu0 0.0
    %79 = vmatprep.subr.mxu0 0.0
    %80 = vmatpush1.xpose.msra.mxu0 0.0
    %81 = vmatprep.subr.mxu0 0.0
    %82 = vmatpush1.xpose.msra.mxu0 0.0
    %83 = vmatprep.subr.mxu0 0.0
    %84 = vmatpush1.xpose.msra.mxu0 0.0
    %85 = vmatprep.subr.mxu0 0.0
    %86 = vmatpush1.xpose.msra.mxu0 0.0
    %87 = vmatprep.subr.mxu0 0.0
    %88 = vmatpush1.xpose.msra.mxu0 0.0
    %89 = vmatprep.subr.mxu0 0.0
    %90 = vmatpush1.xpose.msra.mxu0 0.0
    %91 = vmatprep.subr.mxu0 0.0
    %92 = vmatpush1.xpose.msra.mxu0 0.0
    %93 = vmatprep.mubr.f32.mxu0 %v26
    %94 = vmatmul.mubr.f32.gmra.mrb[0].mxu0 %v25
    %v95 = vpop.f32.mrb[0].mxu0
    %v96 = vadd.f32 0.0, %v95
    %v97 = vpop.f32.mrb[0].mxu0
    %98 = vmatprep.mubr.f32.mxu0 %v28
    %99 = vmatmul.mubr.f32.gmra.mrb[0].mxu0 %v27
    %v100 = vpop.f32.mrb[0].mxu0
    %v101 = vadd.f32 0.0, %v100
    %v102 = vpop.f32.mrb[0].mxu0
    %103 = vdwg.mxu0
    %v104 = vmul.f32 %v25, %v25
    %v105 = vmul.f32 %v26, %v26
    %v106 = vmul.f32 %v27, %v27
    %v107 = vmul.f32 %v28, %v28
    %v108 = vadd.f32 %v104, %v105
    %109 = vadd.xlane.f32.xlu0 %v108
    %v110 = vpop.xlane.xlu0 %109
    %v111 = vadd.f32 %v106, %v107
    %112 = vadd.xlane.f32.xlu0 %v111
    %v113 = vpop.xlane.xlu0 %112
    %114 = vxpose.xlu0.b32.start [1/16] %v110, 128
    %115 = vxpose.xlu0.b32.cont [2/16] %v113, 128
    %116 = vxpose.xlu0.b32.cont [3/16] 0.0, 128
    %117 = vxpose.xlu0.b32.cont [4/16] 0.0, 128
    %118 = vxpose.xlu0.b32.cont [5/16] 0.0, 128
    %119 = vxpose.xlu0.b32.cont [6/16] 0.0, 128
    %120 = vxpose.xlu0.b32.cont [7/16] 0.0, 128
    %121 = vxpose.xlu0.b32.cont [8/16] 0.0, 128
    %122 = vxpose.xlu0.b32.cont [9/16] 0.0, 128
    %123 = vxpose.xlu0.b32.cont [10/16] 0.0, 128
    %124 = vxpose.xlu0.b32.cont [11/16] 0.0, 128
    %125 = vxpose.xlu0.b32.cont [12/16] 0.0, 128
    %126 = vxpose.xlu0.b32.cont [13/16] 0.0, 128
    %127 = vxpose.xlu0.b32.cont [14/16] 0.0, 128
    %128 = vxpose.xlu0.b32.cont [15/16] 0.0, 128
    %129 = vxpose.xlu0.b32.end [16/16] 0.0, 128
    %v130 = vpop.trf.xlu0
    %v131 = vpop.trf.xlu0
    %v132 = vpop.trf.xlu0
    %v133 = vpop.trf.xlu0
    %v134 = vpop.trf.xlu0
    %v135 = vpop.trf.xlu0
    %v136 = vpop.trf.xlu0
    %v137 = vpop.trf.xlu0
    %v138 = vpop.trf.xlu0
    %v139 = vpop.trf.xlu0
    %v140 = vpop.trf.xlu0
    %v141 = vpop.trf.xlu0
    %v142 = vpop.trf.xlu0
    %v143 = vpop.trf.xlu0
    %v144 = vpop.trf.xlu0
    %v145 = vpop.trf.xlu0
    %v146 = vlaneseq
    %v147 = vshrl.u32 %v146, 7
    %v148 = vsub.s32 0, %v147
    %v149 = vrot.slane %v130, %v148
    %v150 = vadd.f32 %v110, %v149
    %v151 = vadd.f32 %v113, %v149
    %v152 = vmul.f32 %v96, 2.0
    %v153 = vmul.f32 %v101, 2.0
    %v154 = vsub.f32 %v150, %v152
    %v155 = vsub.f32 %v151, %v153
    %v156 = vmax.f32 %v154, 0.0
    %v157 = vmax.f32 %v155, 0.0
    %vm158 = vcmask 130048
    %v159 = vsel %vm158, %v156, -inf
    %v160 = vsel %vm158, %v157, -inf
    %v161 = vmax.f32 %v159, %v160
    %162 = vmax.xlane.f32.xlu0 %v161
    %v163 = vpop.xlane.xlu0 %162
    %v164 = vrot.slane %v163, 4
    %v165 = vmax.f32 %v163, %v164
    %v166 = vrot.slane %v165, 2
    %v167 = vmax.f32 %v165, %v166
    %v168 = vrot.slane %v167, 1
    %v169 = vmax.f32 %v167, %v168
    %s170 = vtos %v169
    %s171 = smul.f32 %s170, 0.25
    %v172 = vstv %s171
    %vm173 = vcmp.lt.f32.partialorder %v156, %v172
    %vm174 = vcmp.lt.f32.partialorder %v157, %v172
    %v175 = vsel %vm173, 1, 0
    %v176 = vsel %vm174, 1, 0
    %v177 = vcvt.s32.f32 %v175
    %v178 = vcvt.s32.f32 %v176
    %v179 = vlaneseq
    %v180 = vshrl.u32 %v179, 7
    %v181 = vadd.s32 %v180, 8
    %vm182 = vcmp.lt.s32.totalorder %v180, 0
    %v183 = vsub.s32 0, %v180
    %v184 = vsel %vm182, %v183, %v180
    %v185 = vshrl.u32 %v184, 1
    %v186 = vand.u32 %v184, 1
    %v187 = vsub.s32 0, %v186
    %v188 = vsel %vm182, %v187, %v186
    %vm189 = vcmp.lt.s32.totalorder %v181, 0
    %v190 = vsub.s32 0, %v181
    %v191 = vsel %vm189, %v190, %v181
    %v192 = vshrl.u32 %v191, 1
    %v193 = vand.u32 %v191, 1
    %v194 = vsub.s32 0, %v193
    %v195 = vsel %vm189, %v194, %v193
    %vm196 = vcmp.ne.s32.totalorder %v188, 0
    %vm197 = vcmp.ne.s32.totalorder %v195, 0
    %vm198 = vcmp.lt.s32.totalorder %v188, 0
    %vm199 = vcmp.lt.s32.totalorder %v195, 0
    %vm200 = vmand %vm198, %vm196
    %vm201 = vmand %vm199, %vm197
    %v202 = vadd.s32 %v188, 2
    %v203 = vadd.s32 %v195, 2
    %v204 = vsel %vm200, %v202, %v188
    %v205 = vsel %vm201, %v203, %v195
    %v206 = vlaneseq
    %v207 = vand.u32 %v206, 127
    %vm208 = vcmp.lt.s32.totalorder %v207, 0
    %v209 = vsub.s32 0, %v207
    %v210 = vsel %vm208, %v209, %v207
    %v211 = vshrl.u32 %v210, 1
    %v212 = vand.u32 %v210, 1
    %v213 = vsub.s32 0, %v212
    %v214 = vsel %vm208, %v213, %v212
    %vm215 = vcmp.ne.s32.totalorder %v214, 0
    %vm216 = vcmp.lt.s32.totalorder %v214, 0
    %vm217 = vmand %vm216, %vm215
    %v218 = vadd.s32 %v214, 2
    %v219 = vsel %vm217, %v218, %v214
    %vm220 = vcmp.eq.s32.totalorder %v204, %v219
    %vm221 = vcmp.eq.s32.totalorder %v205, %v219
    %v222 = vsel %vm220, 0.0, %v177
    %v223 = vsel %vm221, 0.0, %v178
    %v224 = vsel %vm158, %v222, 0.0
    %225 = vadd.xlane.f32.xlu0 %v224
    %v226 = vpop.xlane.xlu0 %225
    %v227 = vsel %vm158, %v223, 0.0
    %228 = vadd.xlane.f32.xlu0 %v227
    %v229 = vpop.xlane.xlu0 %228
    %vm230 = vcmp.gt.f32.partialorder %v226, 0.0
    %vm231 = vcmp.gt.f32.partialorder %v229, 0.0
    %v232 = vrsqrt.pop %v226
    %v233 = vrsqrt.pop %v229
    %v234 = vsel %vm230, %v232, 0.0
    %v235 = vsel %vm231, %v233, 0.0
    %v236 = vmul.f32 %v234, %v222
    %v237 = vmul.f32 %v235, %v223
    %238 = vxpose.xlu0.b32.start [1/16] %v234, 128
    %239 = vxpose.xlu0.b32.cont [2/16] %v235, 128
    %240 = vxpose.xlu0.b32.cont [3/16] 0.0, 128
    %241 = vxpose.xlu0.b32.cont [4/16] 0.0, 128
    %242 = vxpose.xlu0.b32.cont [5/16] 0.0, 128
    %243 = vxpose.xlu0.b32.cont [6/16] 0.0, 128
    %244 = vxpose.xlu0.b32.cont [7/16] 0.0, 128
    %245 = vxpose.xlu0.b32.cont [8/16] 0.0, 128
    %246 = vxpose.xlu0.b32.cont [9/16] 0.0, 128
    %247 = vxpose.xlu0.b32.cont [10/16] 0.0, 128
    %248 = vxpose.xlu0.b32.cont [11/16] 0.0, 128
    %249 = vxpose.xlu0.b32.cont [12/16] 0.0, 128
    %250 = vxpose.xlu0.b32.cont [13/16] 0.0, 128
    %251 = vxpose.xlu0.b32.cont [14/16] 0.0, 128
    %252 = vxpose.xlu0.b32.cont [15/16] 0.0, 128
    %253 = vxpose.xlu0.b32.end [16/16] 0.0, 128
    %v254 = vpop.trf.xlu0
    %v255 = vpop.trf.xlu0
    %v256 = vpop.trf.xlu0
    %v257 = vpop.trf.xlu0
    %v258 = vpop.trf.xlu0
    %v259 = vpop.trf.xlu0
    %v260 = vpop.trf.xlu0
    %v261 = vpop.trf.xlu0
    %v262 = vpop.trf.xlu0
    %v263 = vpop.trf.xlu0
    %v264 = vpop.trf.xlu0
    %v265 = vpop.trf.xlu0
    %v266 = vpop.trf.xlu0
    %v267 = vpop.trf.xlu0
    %v268 = vpop.trf.xlu0
    %v269 = vpop.trf.xlu0
    %v270 = vlaneseq
    %v271 = vshrl.u32 %v270, 7
    %v272 = vsub.s32 0, %v271
    %v273 = vrot.slane %v254, %v272
    %v274 = vmul.f32 %v236, %v273
    %v275 = vmul.f32 %v237, %v273
    %v276 = vsub.f32 0.0, %v274
    %v277 = vsub.f32 0.0, %v275
    %v278 = vpack.c.bf16 %v277, %v276
    %v280 = vsel %vm158, %v278, 0
    %282 = vmatprep.subr.bf16.mxu0 0
    %283 = vmatpush1.bf16.msra.mxu0 %v278
    %284 = vmatprep.subr.bf16.mxu0 0
    %285 = vmatpush1.bf16.msra.mxu0 0
    %286 = vmatprep.subr.bf16.mxu0 0
    %287 = vmatpush1.bf16.msra.mxu0 0
    %288 = vmatprep.subr.bf16.mxu0 0
    %289 = vmatpush1.bf16.msra.mxu0 0
    %290 = vmatprep.subr.bf16.mxu0 0
    %291 = vmatpush1.bf16.msra.mxu0 0
    %292 = vmatprep.subr.bf16.mxu0 0
    %293 = vmatpush1.bf16.msra.mxu0 0
    %294 = vmatprep.subr.bf16.mxu0 0
    %295 = vmatpush1.bf16.msra.mxu0 0
    %296 = vmatprep.subr.bf16.mxu0 0
    %297 = vmatpush1.bf16.msra.mxu0 0
    %298 = vmatprep.subr.bf16.mxu0 0
    %299 = vmatpush1.bf16.msra.mxu0 0
    %300 = vmatprep.subr.bf16.mxu0 0
    %301 = vmatpush1.bf16.msra.mxu0 0
    %302 = vmatprep.subr.bf16.mxu0 0
    %303 = vmatpush1.bf16.msra.mxu0 0
    %304 = vmatprep.subr.bf16.mxu0 0
    %305 = vmatpush1.bf16.msra.mxu0 0
    %306 = vmatprep.subr.bf16.mxu0 0
    %307 = vmatpush1.bf16.msra.mxu0 0
    %308 = vmatprep.subr.bf16.mxu0 0
    %309 = vmatpush1.bf16.msra.mxu0 0
    %310 = vmatprep.subr.bf16.mxu0 0
    %311 = vmatpush1.bf16.msra.mxu0 0
    %312 = vmatprep.subr.bf16.mxu0 0
    %313 = vmatpush1.bf16.msra.mxu0 0
    %314 = vmatprep.mubr.bf16.mxu0 0
    %315 = vmatmul.mubr.bf16.gmra.mrb[0].mxu0 %v280
    %v316 = vpop.f32.mrb[0].mxu0
    %v317 = vadd.f32 0.0, %v316
    %v318 = vpop.f32.mrb[0].mxu0
    %v319 = vpop.f32.mrb[0].mxu0
    %v320 = vadd.f32 0.0, %v319
    %v321 = vpop.f32.mrb[0].mxu0
    %322 = vdwg.mxu0
    %v323 = vpack.c.bf16 %v320, %v317
    %v324 = vpack.c.bf16 %v27, %v25
    %v325 = vpack.c.bf16 %v28, %v26
    %326 = vmatprep.subr.bf16.mxu0 %v325
    %327 = vmatpush1.bf16.msra.mxu0 %v324
    %328 = vmatprep.subr.bf16.mxu0 0
    %329 = vmatpush1.bf16.msra.mxu0 0
    %330 = vmatprep.subr.bf16.mxu0 0
    %331 = vmatpush1.bf16.msra.mxu0 0
    %332 = vmatprep.subr.bf16.mxu0 0
    %333 = vmatpush1.bf16.msra.mxu0 0
    %334 = vmatprep.subr.bf16.mxu0 0
    %335 = vmatpush1.bf16.msra.mxu0 0
    %336 = vmatprep.subr.bf16.mxu0 0
    %337 = vmatpush1.bf16.msra.mxu0 0
    %338 = vmatprep.subr.bf16.mxu0 0
    %339 = vmatpush1.bf16.msra.mxu0 0
    %340 = vmatprep.subr.bf16.mxu0 0
    %341 = vmatpush1.bf16.msra.mxu0 0
    %342 = vmatprep.subr.bf16.mxu0 0
    %343 = vmatpush1.bf16.msra.mxu0 0
    %344 = vmatprep.subr.bf16.mxu0 0
    %345 = vmatpush1.bf16.msra.mxu0 0
    %346 = vmatprep.subr.bf16.mxu0 0
    %347 = vmatpush1.bf16.msra.mxu0 0
    %348 = vmatprep.subr.bf16.mxu0 0
    %349 = vmatpush1.bf16.msra.mxu0 0
    %350 = vmatprep.subr.bf16.mxu0 0
    %351 = vmatpush1.bf16.msra.mxu0 0
    %352 = vmatprep.subr.bf16.mxu0 0
    %353 = vmatpush1.bf16.msra.mxu0 0
    %354 = vmatprep.subr.bf16.mxu0 0
    %355 = vmatpush1.bf16.msra.mxu0 0
    %356 = vmatprep.subr.bf16.mxu0 0
    %357 = vmatpush1.bf16.msra.mxu0 0
    %358 = vmatprep.mubr.bf16.mxu0 0
    %359 = vmatmul.mubr.bf16.gmra.mrb[0].mxu0 %v280
    %v360 = vpop.f32.mrb[0].mxu0
    %v361 = vadd.f32 0.0, %v360
    %v362 = vpop.f32.mrb[0].mxu0
    %v363 = vadd.f32 0.0, %v362
    %v364 = vpop.f32.mrb[0].mxu0
    %v365 = vadd.f32 0.0, %v364
    %v366 = vpop.f32.mrb[0].mxu0
    %v367 = vadd.f32 0.0, %v366
    %368 = vdwg.mxu0
    %v370 = vsel %vm158, %v323, 0
    %372 = vmatprep.subr.bf16.mxu0 %v325
    %373 = vmatpush1.bf16.msra.mxu0 %v324
    %374 = vmatprep.subr.bf16.mxu0 0
    %375 = vmatpush1.bf16.msra.mxu0 0
    %376 = vmatprep.subr.bf16.mxu0 0
    %377 = vmatpush1.bf16.msra.mxu0 0
    %378 = vmatprep.subr.bf16.mxu0 0
    %379 = vmatpush1.bf16.msra.mxu0 0
    %380 = vmatprep.subr.bf16.mxu0 0
    %381 = vmatpush1.bf16.msra.mxu0 0
    %382 = vmatprep.subr.bf16.mxu0 0
    %383 = vmatpush1.bf16.msra.mxu0 0
    %384 = vmatprep.subr.bf16.mxu0 0
    %385 = vmatpush1.bf16.msra.mxu0 0
    %386 = vmatprep.subr.bf16.mxu0 0
    %387 = vmatpush1.bf16.msra.mxu0 0
    %388 = vmatprep.subr.bf16.mxu0 0
    %389 = vmatpush1.bf16.msra.mxu0 0
    %390 = vmatprep.subr.bf16.mxu0 0
    %391 = vmatpush1.bf16.msra.mxu0 0
    %392 = vmatprep.subr.bf16.mxu0 0
    %393 = vmatpush1.bf16.msra.mxu0 0
    %394 = vmatprep.subr.bf16.mxu0 0
    %395 = vmatpush1.bf16.msra.mxu0 0
    %396 = vmatprep.subr.bf16.mxu0 0
    %397 = vmatpush1.bf16.msra.mxu0 0
    %398 = vmatprep.subr.bf16.mxu0 0
    %399 = vmatpush1.bf16.msra.mxu0 0
    %400 = vmatprep.subr.bf16.mxu0 0
    %401 = vmatpush1.bf16.msra.mxu0 0
    %402 = vmatprep.subr.bf16.mxu0 0
    %403 = vmatpush1.bf16.msra.mxu0 0
    %404 = vmatprep.mubr.bf16.mxu0 0
    %405 = vmatmul.mubr.bf16.gmra.mrb[0].mxu0 %v370
    %v406 = vpop.f32.mrb[0].mxu0
    %v407 = vadd.f32 0.0, %v406
    %v408 = vpop.f32.mrb[0].mxu0
    %v409 = vadd.f32 0.0, %v408
    %v410 = vpop.f32.mrb[0].mxu0
    %v411 = vadd.f32 0.0, %v410
    %v412 = vpop.f32.mrb[0].mxu0
    %v413 = vadd.f32 0.0, %v412
    %414 = vdwg.mxu0
    %v415 = vmul.f32 %v407, 2.0
    %v416 = vmul.f32 %v409, 2.0
    %v417 = vmul.f32 %v411, 2.0
    %v418 = vmul.f32 %v413, 2.0
    %v419 = vsub.f32 %v415, %v25
    %v420 = vsub.f32 %v416, %v26
    %v421 = vsub.f32 %v417, %v27
    %v422 = vsub.f32 %v418, %v28
    %v423 = vld [vmem:[%s1] sm:$0xff]
    %v424 = vld [vmem:[%s1 + $0x8] sm:$0xff]
    %v425 = vld [vmem:[%s1 + $0x10] sm:$0xff]
    %v426 = vld [vmem:[%s1 + $0x18] sm:$0xff]
    %v427 = vld [vmem:[%s1 + $0x20] sm:$0xff]
    %v428 = vld [vmem:[%s1 + $0x28] sm:$0xff]
    %v429 = vld [vmem:[%s1 + $0x30] sm:$0xff]
    %v430 = vld [vmem:[%s1 + $0x38] sm:$0xff]
    %v431 = vld [vmem:[%s1 + $0x40] sm:$0xff]
    %v432 = vld [vmem:[%s1 + $0x48] sm:$0xff]
    %v433 = vld [vmem:[%s1 + $0x50] sm:$0xff]
    %v434 = vld [vmem:[%s1 + $0x58] sm:$0xff]
    %v435 = vld [vmem:[%s1 + $0x60] sm:$0xff]
    %v436 = vld [vmem:[%s1 + $0x68] sm:$0xff]
    %v437 = vld [vmem:[%s1 + $0x70] sm:$0xff]
    %v438 = vld [vmem:[%s1 + $0x78] sm:$0xff]
    %v439 = vld [vmem:[%s1 + $0x80] sm:$0xff]
    %v440 = vld [vmem:[%s1 + $0x88] sm:$0xff]
    %v441 = vld [vmem:[%s1 + $0x90] sm:$0xff]
    %v442 = vld [vmem:[%s1 + $0x98] sm:$0xff]
    %v443 = vld [vmem:[%s1 + $0xa0] sm:$0xff]
    %v444 = vld [vmem:[%s1 + $0xa8] sm:$0xff]
    %v445 = vld [vmem:[%s1 + $0xb0] sm:$0xff]
    %v446 = vld [vmem:[%s1 + $0xb8] sm:$0xff]
    %v447 = vld [vmem:[%s1 + $0xc0] sm:$0xff]
    %v448 = vld [vmem:[%s1 + $0xc8] sm:$0xff]
    %v449 = vld [vmem:[%s1 + $0xd0] sm:$0xff]
    %v450 = vld [vmem:[%s1 + $0xd8] sm:$0xff]
    %v451 = vld [vmem:[%s1 + $0xe0] sm:$0xff]
    %v452 = vld [vmem:[%s1 + $0xe8] sm:$0xff]
    %v453 = vld [vmem:[%s1 + $0xf0] sm:$0xff]
    %v454 = vld [vmem:[%s1 + $0xf8] sm:$0xff]
    %v455 = vpack.c.bf16 %v365, %v361
    %v456 = vpack.c.bf16 %v367, %v363
    %s457 = scalar_lea.vmem %s1, 256
    %v458 = vld [vmem:[%s457] sm:$0xff]
    %v459 = vld [vmem:[%s457 + $0x8] sm:$0xff]
    %v460 = vld [vmem:[%s457 + $0x10] sm:$0xff]
    %v461 = vld [vmem:[%s457 + $0x18] sm:$0xff]
    %v462 = vld [vmem:[%s457 + $0x20] sm:$0xff]
    %v463 = vld [vmem:[%s457 + $0x28] sm:$0xff]
    %v464 = vld [vmem:[%s457 + $0x30] sm:$0xff]
    %v465 = vld [vmem:[%s457 + $0x38] sm:$0xff]
    %v466 = vld [vmem:[%s457 + $0x40] sm:$0xff]
    %v467 = vld [vmem:[%s457 + $0x48] sm:$0xff]
    %v468 = vld [vmem:[%s457 + $0x50] sm:$0xff]
    %v469 = vld [vmem:[%s457 + $0x58] sm:$0xff]
    %v470 = vld [vmem:[%s457 + $0x60] sm:$0xff]
    %v471 = vld [vmem:[%s457 + $0x68] sm:$0xff]
    %v472 = vld [vmem:[%s457 + $0x70] sm:$0xff]
    %v473 = vld [vmem:[%s457 + $0x78] sm:$0xff]
    %v474 = vld [vmem:[%s457 + $0x80] sm:$0xff]
    %v475 = vld [vmem:[%s457 + $0x88] sm:$0xff]
    %v476 = vld [vmem:[%s457 + $0x90] sm:$0xff]
    %v477 = vld [vmem:[%s457 + $0x98] sm:$0xff]
    %v478 = vld [vmem:[%s457 + $0xa0] sm:$0xff]
    %v479 = vld [vmem:[%s457 + $0xa8] sm:$0xff]
    %v480 = vld [vmem:[%s457 + $0xb0] sm:$0xff]
    %v481 = vld [vmem:[%s457 + $0xb8] sm:$0xff]
    %v482 = vld [vmem:[%s457 + $0xc0] sm:$0xff]
    %v483 = vld [vmem:[%s457 + $0xc8] sm:$0xff]
    %v484 = vld [vmem:[%s457 + $0xd0] sm:$0xff]
    %v485 = vld [vmem:[%s457 + $0xd8] sm:$0xff]
    %v486 = vld [vmem:[%s457 + $0xe0] sm:$0xff]
    %v487 = vld [vmem:[%s457 + $0xe8] sm:$0xff]
    %v488 = vld [vmem:[%s457 + $0xf0] sm:$0xff]
    %v489 = vld [vmem:[%s457 + $0xf8] sm:$0xff]
    %v522 = vunpack.c.l.b16 %v458
    %v523 = vunpack.c.h.b16 %v458
    %v524 = vunpack.c.l.b16 %v459
    %v525 = vunpack.c.h.b16 %v459
    %v526 = vunpack.c.l.b16 %v460
    %v527 = vunpack.c.h.b16 %v460
    %v528 = vunpack.c.l.b16 %v461
    %v529 = vunpack.c.h.b16 %v461
    %v530 = vunpack.c.l.b16 %v462
    %v531 = vunpack.c.h.b16 %v462
    %v532 = vunpack.c.l.b16 %v463
    %v533 = vunpack.c.h.b16 %v463
    %v534 = vunpack.c.l.b16 %v464
    %v535 = vunpack.c.h.b16 %v464
    %v536 = vunpack.c.l.b16 %v465
    %v537 = vunpack.c.h.b16 %v465
    %v538 = vunpack.c.l.b16 %v466
    %v539 = vunpack.c.h.b16 %v466
    %v540 = vunpack.c.l.b16 %v467
    %v541 = vunpack.c.h.b16 %v467
    %v542 = vunpack.c.l.b16 %v468
    %v543 = vunpack.c.h.b16 %v468
    %v544 = vunpack.c.l.b16 %v469
    %v545 = vunpack.c.h.b16 %v469
    %v546 = vunpack.c.l.b16 %v470
    %v547 = vunpack.c.h.b16 %v470
    %v548 = vunpack.c.l.b16 %v471
    %v549 = vunpack.c.h.b16 %v471
    %v550 = vunpack.c.l.b16 %v472
    %v551 = vunpack.c.h.b16 %v472
    %v552 = vunpack.c.l.b16 %v473
    %v553 = vunpack.c.h.b16 %v473
    %v554 = vunpack.c.l.b16 %v474
    %v555 = vunpack.c.h.b16 %v474
    %v556 = vunpack.c.l.b16 %v475
    %v557 = vunpack.c.h.b16 %v475
    %v558 = vunpack.c.l.b16 %v476
    %v559 = vunpack.c.h.b16 %v476
    %v560 = vunpack.c.l.b16 %v477
    %v561 = vunpack.c.h.b16 %v477
    %v562 = vunpack.c.l.b16 %v478
    %v563 = vunpack.c.h.b16 %v478
    %v564 = vunpack.c.l.b16 %v479
    %v565 = vunpack.c.h.b16 %v479
    %v566 = vunpack.c.l.b16 %v480
    %v567 = vunpack.c.h.b16 %v480
    %v568 = vunpack.c.l.b16 %v481
    %v569 = vunpack.c.h.b16 %v481
    %v570 = vunpack.c.l.b16 %v482
    %v571 = vunpack.c.h.b16 %v482
    %v572 = vunpack.c.l.b16 %v483
    %v573 = vunpack.c.h.b16 %v483
    %v574 = vunpack.c.l.b16 %v484
    %v575 = vunpack.c.h.b16 %v484
    %v576 = vunpack.c.l.b16 %v485
    %v577 = vunpack.c.h.b16 %v485
    %v578 = vunpack.c.l.b16 %v486
    %v579 = vunpack.c.h.b16 %v486
    %v580 = vunpack.c.l.b16 %v487
    %v581 = vunpack.c.h.b16 %v487
    %v582 = vunpack.c.l.b16 %v488
    %v583 = vunpack.c.h.b16 %v488
    %v584 = vunpack.c.l.b16 %v489
    %v585 = vunpack.c.h.b16 %v489
    %v586 = vpack.c.b16 %v524, %v522
    %v587 = vpack.c.b16 %v525, %v523
    %v588 = vpack.c.b16 %v528, %v526
    %v589 = vpack.c.b16 %v529, %v527
    %v590 = vpack.c.b16 %v532, %v530
    %v591 = vpack.c.b16 %v533, %v531
    %v592 = vpack.c.b16 %v536, %v534
    %v593 = vpack.c.b16 %v537, %v535
    %v594 = vpack.c.b16 %v540, %v538
    %v595 = vpack.c.b16 %v541, %v539
    %v596 = vpack.c.b16 %v544, %v542
    %v597 = vpack.c.b16 %v545, %v543
    %v598 = vpack.c.b16 %v548, %v546
    %v599 = vpack.c.b16 %v549, %v547
    %v600 = vpack.c.b16 %v552, %v550
    %v601 = vpack.c.b16 %v553, %v551
    %v602 = vpack.c.b16 %v556, %v554
    %v603 = vpack.c.b16 %v557, %v555
    %v604 = vpack.c.b16 %v560, %v558
    %v605 = vpack.c.b16 %v561, %v559
    %v606 = vpack.c.b16 %v564, %v562
    %v607 = vpack.c.b16 %v565, %v563
    %v608 = vpack.c.b16 %v568, %v566
    %v609 = vpack.c.b16 %v569, %v567
    %v610 = vpack.c.b16 %v572, %v570
    %v611 = vpack.c.b16 %v573, %v571
    %v612 = vpack.c.b16 %v576, %v574
    %v613 = vpack.c.b16 %v577, %v575
    %v614 = vpack.c.b16 %v580, %v578
    %v615 = vpack.c.b16 %v581, %v579
    %v616 = vpack.c.b16 %v584, %v582
    %v617 = vpack.c.b16 %v585, %v583
    %650 = vmatprep.subr.bf16.mxu0 %v587
    %651 = vmatpush1.bf16.msra.mxu0 %v586
    %652 = vmatprep.subr.bf16.mxu0 %v589
    %653 = vmatpush1.bf16.msra.mxu0 %v588
    %654 = vmatprep.subr.bf16.mxu0 %v591
    %655 = vmatpush1.bf16.msra.mxu0 %v590
    %656 = vmatprep.subr.bf16.mxu0 %v593
    %657 = vmatpush1.bf16.msra.mxu0 %v592
    %658 = vmatprep.subr.bf16.mxu0 %v595
    %659 = vmatpush1.bf16.msra.mxu0 %v594
    %660 = vmatprep.subr.bf16.mxu0 %v597
    %661 = vmatpush1.bf16.msra.mxu0 %v596
    %662 = vmatprep.subr.bf16.mxu0 %v599
    %663 = vmatpush1.bf16.msra.mxu0 %v598
    %664 = vmatprep.subr.bf16.mxu0 %v601
    %665 = vmatpush1.bf16.msra.mxu0 %v600
    %666 = vmatprep.subr.bf16.mxu0 %v603
    %667 = vmatpush1.bf16.msra.mxu0 %v602
    %668 = vmatprep.subr.bf16.mxu0 %v605
    %669 = vmatpush1.bf16.msra.mxu0 %v604
    %670 = vmatprep.subr.bf16.mxu0 %v607
    %671 = vmatpush1.bf16.msra.mxu0 %v606
    %672 = vmatprep.subr.bf16.mxu0 %v609
    %673 = vmatpush1.bf16.msra.mxu0 %v608
    %674 = vmatprep.subr.bf16.mxu0 %v611
    %675 = vmatpush1.bf16.msra.mxu0 %v610
    %676 = vmatprep.subr.bf16.mxu0 %v613
    %677 = vmatpush1.bf16.msra.mxu0 %v612
    %678 = vmatprep.subr.bf16.mxu0 %v615
    %679 = vmatpush1.bf16.msra.mxu0 %v614
    %680 = vmatprep.subr.bf16.mxu0 %v617
    %681 = vmatpush1.bf16.msra.mxu0 %v616
    %682 = vmatprep.mubr.bf16.mxu0 %v456
    %683 = vmatmul.mubr.bf16.gmra.mrb[0].mxu0 %v455
    %v684 = vpop.f32.mrb[0].mxu0
    %v685 = vadd.f32 0.0, %v684
    %v686 = vpop.f32.mrb[0].mxu0
    %v687 = vadd.f32 0.0, %v686
    %v688 = vpop.f32.mrb[0].mxu0
    %v689 = vadd.f32 0.0, %v688
    %v690 = vpop.f32.mrb[0].mxu0
    %v691 = vadd.f32 0.0, %v690
    %692 = vdwg.mxu0
    %v725 = vunpack.c.l.b16 %v423
    %v726 = vunpack.c.h.b16 %v423
    %v727 = vunpack.c.l.b16 %v424
    %v728 = vunpack.c.h.b16 %v424
    %v729 = vunpack.c.l.b16 %v425
    %v730 = vunpack.c.h.b16 %v425
    %v731 = vunpack.c.l.b16 %v426
    %v732 = vunpack.c.h.b16 %v426
    %v733 = vunpack.c.l.b16 %v427
    %v734 = vunpack.c.h.b16 %v427
    %v735 = vunpack.c.l.b16 %v428
    %v736 = vunpack.c.h.b16 %v428
    %v737 = vunpack.c.l.b16 %v429
    %v738 = vunpack.c.h.b16 %v429
    %v739 = vunpack.c.l.b16 %v430
    %v740 = vunpack.c.h.b16 %v430
    %v741 = vunpack.c.l.b16 %v431
    %v742 = vunpack.c.h.b16 %v431
    %v743 = vunpack.c.l.b16 %v432
    %v744 = vunpack.c.h.b16 %v432
    %v745 = vunpack.c.l.b16 %v433
    %v746 = vunpack.c.h.b16 %v433
    %v747 = vunpack.c.l.b16 %v434
    %v748 = vunpack.c.h.b16 %v434
    %v749 = vunpack.c.l.b16 %v435
    %v750 = vunpack.c.h.b16 %v435
    %v751 = vunpack.c.l.b16 %v436
    %v752 = vunpack.c.h.b16 %v436
    %v753 = vunpack.c.l.b16 %v437
    %v754 = vunpack.c.h.b16 %v437
    %v755 = vunpack.c.l.b16 %v438
    %v756 = vunpack.c.h.b16 %v438
    %v757 = vunpack.c.l.b16 %v439
    %v758 = vunpack.c.h.b16 %v439
    %v759 = vunpack.c.l.b16 %v440
    %v760 = vunpack.c.h.b16 %v440
    %v761 = vunpack.c.l.b16 %v441
    %v762 = vunpack.c.h.b16 %v441
    %v763 = vunpack.c.l.b16 %v442
    %v764 = vunpack.c.h.b16 %v442
    %v765 = vunpack.c.l.b16 %v443
    %v766 = vunpack.c.h.b16 %v443
    %v767 = vunpack.c.l.b16 %v444
    %v768 = vunpack.c.h.b16 %v444
    %v769 = vunpack.c.l.b16 %v445
    %v770 = vunpack.c.h.b16 %v445
    %v771 = vunpack.c.l.b16 %v446
    %v772 = vunpack.c.h.b16 %v446
    %v773 = vunpack.c.l.b16 %v447
    %v774 = vunpack.c.h.b16 %v447
    %v775 = vunpack.c.l.b16 %v448
    %v776 = vunpack.c.h.b16 %v448
    %v777 = vunpack.c.l.b16 %v449
    %v778 = vunpack.c.h.b16 %v449
    %v779 = vunpack.c.l.b16 %v450
    %v780 = vunpack.c.h.b16 %v450
    %v781 = vunpack.c.l.b16 %v451
    %v782 = vunpack.c.h.b16 %v451
    %v783 = vunpack.c.l.b16 %v452
    %v784 = vunpack.c.h.b16 %v452
    %v785 = vunpack.c.l.b16 %v453
    %v786 = vunpack.c.h.b16 %v453
    %v787 = vunpack.c.l.b16 %v454
    %v788 = vunpack.c.h.b16 %v454
    %v789 = vpack.c.b16 %v727, %v725
    %v790 = vpack.c.b16 %v728, %v726
    %v791 = vpack.c.b16 %v731, %v729
    %v792 = vpack.c.b16 %v732, %v730
    %v793 = vpack.c.b16 %v735, %v733
    %v794 = vpack.c.b16 %v736, %v734
    %v795 = vpack.c.b16 %v739, %v737
    %v796 = vpack.c.b16 %v740, %v738
    %v797 = vpack.c.b16 %v743, %v741
    %v798 = vpack.c.b16 %v744, %v742
    %v799 = vpack.c.b16 %v747, %v745
    %v800 = vpack.c.b16 %v748, %v746
    %v801 = vpack.c.b16 %v751, %v749
    %v802 = vpack.c.b16 %v752, %v750
    %v803 = vpack.c.b16 %v755, %v753
    %v804 = vpack.c.b16 %v756, %v754
    %v805 = vpack.c.b16 %v759, %v757
    %v806 = vpack.c.b16 %v760, %v758
    %v807 = vpack.c.b16 %v763, %v761
    %v808 = vpack.c.b16 %v764, %v762
    %v809 = vpack.c.b16 %v767, %v765
    %v810 = vpack.c.b16 %v768, %v766
    %v811 = vpack.c.b16 %v771, %v769
    %v812 = vpack.c.b16 %v772, %v770
    %v813 = vpack.c.b16 %v775, %v773
    %v814 = vpack.c.b16 %v776, %v774
    %v815 = vpack.c.b16 %v779, %v777
    %v816 = vpack.c.b16 %v780, %v778
    %v817 = vpack.c.b16 %v783, %v781
    %v818 = vpack.c.b16 %v784, %v782
    %v819 = vpack.c.b16 %v787, %v785
    %v820 = vpack.c.b16 %v788, %v786
    %853 = vmatprep.subr.bf16.mxu0 %v790
    %854 = vmatpush1.bf16.msra.mxu0 %v789
    %855 = vmatprep.subr.bf16.mxu0 %v792
    %856 = vmatpush1.bf16.msra.mxu0 %v791
    %857 = vmatprep.subr.bf16.mxu0 %v794
    %858 = vmatpush1.bf16.msra.mxu0 %v793
    %859 = vmatprep.subr.bf16.mxu0 %v796
    %860 = vmatpush1.bf16.msra.mxu0 %v795
    %861 = vmatprep.subr.bf16.mxu0 %v798
    %862 = vmatpush1.bf16.msra.mxu0 %v797
    %863 = vmatprep.subr.bf16.mxu0 %v800
    %864 = vmatpush1.bf16.msra.mxu0 %v799
    %865 = vmatprep.subr.bf16.mxu0 %v802
    %866 = vmatpush1.bf16.msra.mxu0 %v801
    %867 = vmatprep.subr.bf16.mxu0 %v804
    %868 = vmatpush1.bf16.msra.mxu0 %v803
    %869 = vmatprep.subr.bf16.mxu0 %v806
    %870 = vmatpush1.bf16.msra.mxu0 %v805
    %871 = vmatprep.subr.bf16.mxu0 %v808
    %872 = vmatpush1.bf16.msra.mxu0 %v807
    %873 = vmatprep.subr.bf16.mxu0 %v810
    %874 = vmatpush1.bf16.msra.mxu0 %v809
    %875 = vmatprep.subr.bf16.mxu0 %v812
    %876 = vmatpush1.bf16.msra.mxu0 %v811
    %877 = vmatprep.subr.bf16.mxu0 %v814
    %878 = vmatpush1.bf16.msra.mxu0 %v813
    %879 = vmatprep.subr.bf16.mxu0 %v816
    %880 = vmatpush1.bf16.msra.mxu0 %v815
    %881 = vmatprep.subr.bf16.mxu0 %v818
    %882 = vmatpush1.bf16.msra.mxu0 %v817
    %883 = vmatprep.subr.bf16.mxu0 %v820
    %884 = vmatpush1.bf16.msra.mxu0 %v819
    %885 = vmatprep.mubr.bf16.mxu0 %v325
    %886 = vmatmul.mubr.bf16.gmra.mrb[0].mxu0 %v324
    %v887 = vpop.f32.mrb[0].mxu0
    %v888 = vadd.f32 %v685, %v887
    %v889 = vpop.f32.mrb[0].mxu0
    %v890 = vadd.f32 %v687, %v889
    %v891 = vpop.f32.mrb[0].mxu0
    %v892 = vadd.f32 %v689, %v891
    %v893 = vpop.f32.mrb[0].mxu0
    %v894 = vadd.f32 %v691, %v893
    %895 = vdwg.mxu0
    %v896 = vpack.c.bf16 %v421, %v419
    %v897 = vpack.c.bf16 %v422, %v420
    %s898 = scalar_lea.vmem %s1, 512
    %v899 = vld [vmem:[%s898] sm:$0xff]
    %v900 = vld [vmem:[%s898 + $0x8] sm:$0xff]
    %v901 = vld [vmem:[%s898 + $0x10] sm:$0xff]
    %v902 = vld [vmem:[%s898 + $0x18] sm:$0xff]
    %v903 = vld [vmem:[%s898 + $0x20] sm:$0xff]
    %v904 = vld [vmem:[%s898 + $0x28] sm:$0xff]
    %v905 = vld [vmem:[%s898 + $0x30] sm:$0xff]
    %v906 = vld [vmem:[%s898 + $0x38] sm:$0xff]
    %v907 = vld [vmem:[%s898 + $0x40] sm:$0xff]
    %v908 = vld [vmem:[%s898 + $0x48] sm:$0xff]
    %v909 = vld [vmem:[%s898 + $0x50] sm:$0xff]
    %v910 = vld [vmem:[%s898 + $0x58] sm:$0xff]
    %v911 = vld [vmem:[%s898 + $0x60] sm:$0xff]
    %v912 = vld [vmem:[%s898 + $0x68] sm:$0xff]
    %v913 = vld [vmem:[%s898 + $0x70] sm:$0xff]
    %v914 = vld [vmem:[%s898 + $0x78] sm:$0xff]
    %v915 = vld [vmem:[%s898 + $0x80] sm:$0xff]
    %v916 = vld [vmem:[%s898 + $0x88] sm:$0xff]
    %v917 = vld [vmem:[%s898 + $0x90] sm:$0xff]
    %v918 = vld [vmem:[%s898 + $0x98] sm:$0xff]
    %v919 = vld [vmem:[%s898 + $0xa0] sm:$0xff]
    %v920 = vld [vmem:[%s898 + $0xa8] sm:$0xff]
    %v921 = vld [vmem:[%s898 + $0xb0] sm:$0xff]
    %v922 = vld [vmem:[%s898 + $0xb8] sm:$0xff]
    %v923 = vld [vmem:[%s898 + $0xc0] sm:$0xff]
    %v924 = vld [vmem:[%s898 + $0xc8] sm:$0xff]
    %v925 = vld [vmem:[%s898 + $0xd0] sm:$0xff]
    %v926 = vld [vmem:[%s898 + $0xd8] sm:$0xff]
    %v927 = vld [vmem:[%s898 + $0xe0] sm:$0xff]
    %v928 = vld [vmem:[%s898 + $0xe8] sm:$0xff]
    %v929 = vld [vmem:[%s898 + $0xf0] sm:$0xff]
    %v930 = vld [vmem:[%s898 + $0xf8] sm:$0xff]
    %v963 = vunpack.c.l.b16 %v899
    %v964 = vunpack.c.h.b16 %v899
    %v965 = vunpack.c.l.b16 %v900
    %v966 = vunpack.c.h.b16 %v900
    %v967 = vunpack.c.l.b16 %v901
    %v968 = vunpack.c.h.b16 %v901
    %v969 = vunpack.c.l.b16 %v902
    %v970 = vunpack.c.h.b16 %v902
    %v971 = vunpack.c.l.b16 %v903
    %v972 = vunpack.c.h.b16 %v903
    %v973 = vunpack.c.l.b16 %v904
    %v974 = vunpack.c.h.b16 %v904
    %v975 = vunpack.c.l.b16 %v905
    %v976 = vunpack.c.h.b16 %v905
    %v977 = vunpack.c.l.b16 %v906
    %v978 = vunpack.c.h.b16 %v906
    %v979 = vunpack.c.l.b16 %v907
    %v980 = vunpack.c.h.b16 %v907
    %v981 = vunpack.c.l.b16 %v908
    %v982 = vunpack.c.h.b16 %v908
    %v983 = vunpack.c.l.b16 %v909
    %v984 = vunpack.c.h.b16 %v909
    %v985 = vunpack.c.l.b16 %v910
    %v986 = vunpack.c.h.b16 %v910
    %v987 = vunpack.c.l.b16 %v911
    %v988 = vunpack.c.h.b16 %v911
    %v989 = vunpack.c.l.b16 %v912
    %v990 = vunpack.c.h.b16 %v912
    %v991 = vunpack.c.l.b16 %v913
    %v992 = vunpack.c.h.b16 %v913
    %v993 = vunpack.c.l.b16 %v914
    %v994 = vunpack.c.h.b16 %v914
    %v995 = vunpack.c.l.b16 %v915
    %v996 = vunpack.c.h.b16 %v915
    %v997 = vunpack.c.l.b16 %v916
    %v998 = vunpack.c.h.b16 %v916
    %v999 = vunpack.c.l.b16 %v917
    %v1000 = vunpack.c.h.b16 %v917
    %v1001 = vunpack.c.l.b16 %v918
    %v1002 = vunpack.c.h.b16 %v918
    %v1003 = vunpack.c.l.b16 %v919
    %v1004 = vunpack.c.h.b16 %v919
    %v1005 = vunpack.c.l.b16 %v920
    %v1006 = vunpack.c.h.b16 %v920
    %v1007 = vunpack.c.l.b16 %v921
    %v1008 = vunpack.c.h.b16 %v921
    %v1009 = vunpack.c.l.b16 %v922
    %v1010 = vunpack.c.h.b16 %v922
    %v1011 = vunpack.c.l.b16 %v923
    %v1012 = vunpack.c.h.b16 %v923
    %v1013 = vunpack.c.l.b16 %v924
    %v1014 = vunpack.c.h.b16 %v924
    %v1015 = vunpack.c.l.b16 %v925
    %v1016 = vunpack.c.h.b16 %v925
    %v1017 = vunpack.c.l.b16 %v926
    %v1018 = vunpack.c.h.b16 %v926
    %v1019 = vunpack.c.l.b16 %v927
    %v1020 = vunpack.c.h.b16 %v927
    %v1021 = vunpack.c.l.b16 %v928
    %v1022 = vunpack.c.h.b16 %v928
    %v1023 = vunpack.c.l.b16 %v929
    %v1024 = vunpack.c.h.b16 %v929
    %v1025 = vunpack.c.l.b16 %v930
    %v1026 = vunpack.c.h.b16 %v930
    %v1027 = vpack.c.b16 %v965, %v963
    %v1028 = vpack.c.b16 %v966, %v964
    %v1029 = vpack.c.b16 %v969, %v967
    %v1030 = vpack.c.b16 %v970, %v968
    %v1031 = vpack.c.b16 %v973, %v971
    %v1032 = vpack.c.b16 %v974, %v972
    %v1033 = vpack.c.b16 %v977, %v975
    %v1034 = vpack.c.b16 %v978, %v976
    %v1035 = vpack.c.b16 %v981, %v979
    %v1036 = vpack.c.b16 %v982, %v980
    %v1037 = vpack.c.b16 %v985, %v983
    %v1038 = vpack.c.b16 %v986, %v984
    %v1039 = vpack.c.b16 %v989, %v987
    %v1040 = vpack.c.b16 %v990, %v988
    %v1041 = vpack.c.b16 %v993, %v991
    %v1042 = vpack.c.b16 %v994, %v992
    %v1043 = vpack.c.b16 %v997, %v995
    %v1044 = vpack.c.b16 %v998, %v996
    %v1045 = vpack.c.b16 %v1001, %v999
    %v1046 = vpack.c.b16 %v1002, %v1000
    %v1047 = vpack.c.b16 %v1005, %v1003
    %v1048 = vpack.c.b16 %v1006, %v1004
    %v1049 = vpack.c.b16 %v1009, %v1007
    %v1050 = vpack.c.b16 %v1010, %v1008
    %v1051 = vpack.c.b16 %v1013, %v1011
    %v1052 = vpack.c.b16 %v1014, %v1012
    %v1053 = vpack.c.b16 %v1017, %v1015
    %v1054 = vpack.c.b16 %v1018, %v1016
    %v1055 = vpack.c.b16 %v1021, %v1019
    %v1056 = vpack.c.b16 %v1022, %v1020
    %v1057 = vpack.c.b16 %v1025, %v1023
    %v1058 = vpack.c.b16 %v1026, %v1024
    %1091 = vmatprep.subr.bf16.mxu0 %v1028
    %1092 = vmatpush1.bf16.msra.mxu0 %v1027
    %1093 = vmatprep.subr.bf16.mxu0 %v1030
    %1094 = vmatpush1.bf16.msra.mxu0 %v1029
    %1095 = vmatprep.subr.bf16.mxu0 %v1032
    %1096 = vmatpush1.bf16.msra.mxu0 %v1031
    %1097 = vmatprep.subr.bf16.mxu0 %v1034
    %1098 = vmatpush1.bf16.msra.mxu0 %v1033
    %1099 = vmatprep.subr.bf16.mxu0 %v1036
    %1100 = vmatpush1.bf16.msra.mxu0 %v1035
    %1101 = vmatprep.subr.bf16.mxu0 %v1038
    %1102 = vmatpush1.bf16.msra.mxu0 %v1037
    %1103 = vmatprep.subr.bf16.mxu0 %v1040
    %1104 = vmatpush1.bf16.msra.mxu0 %v1039
    %1105 = vmatprep.subr.bf16.mxu0 %v1042
    %1106 = vmatpush1.bf16.msra.mxu0 %v1041
    %1107 = vmatprep.subr.bf16.mxu0 %v1044
    %1108 = vmatpush1.bf16.msra.mxu0 %v1043
    %1109 = vmatprep.subr.bf16.mxu0 %v1046
    %1110 = vmatpush1.bf16.msra.mxu0 %v1045
    %1111 = vmatprep.subr.bf16.mxu0 %v1048
    %1112 = vmatpush1.bf16.msra.mxu0 %v1047
    %1113 = vmatprep.subr.bf16.mxu0 %v1050
    %1114 = vmatpush1.bf16.msra.mxu0 %v1049
    %1115 = vmatprep.subr.bf16.mxu0 %v1052
    %1116 = vmatpush1.bf16.msra.mxu0 %v1051
    %1117 = vmatprep.subr.bf16.mxu0 %v1054
    %1118 = vmatpush1.bf16.msra.mxu0 %v1053
    %1119 = vmatprep.subr.bf16.mxu0 %v1056
    %1120 = vmatpush1.bf16.msra.mxu0 %v1055
    %1121 = vmatprep.subr.bf16.mxu0 %v1058
    %1122 = vmatpush1.bf16.msra.mxu0 %v1057
    %1123 = vmatprep.mubr.bf16.mxu0 %v897
    %1124 = vmatmul.mubr.bf16.gmra.mrb[0].mxu0 %v896
    %v1125 = vpop.f32.mrb[0].mxu0
    %v1126 = vadd.f32 0.0, %v1125
    %v1127 = vpop.f32.mrb[0].mxu0
    %v1128 = vadd.f32 0.0, %v1127
    %v1129 = vpop.f32.mrb[0].mxu0
    %v1130 = vadd.f32 0.0, %v1129
    %v1131 = vpop.f32.mrb[0].mxu0
    %v1132 = vadd.f32 0.0, %v1131
    %1133 = vdwg.mxu0
    %v1134 = vadd.f32 %v888, %v1126
    %v1135 = vadd.f32 %v890, %v1128
    %v1136 = vadd.f32 %v892, %v1130
    %v1137 = vadd.f32 %v894, %v1132
    %v1138 = vld [vmem:[%s2] sm:$0x3]
    %v1140 = vlaneseq
    %v1141 = vshrl.u32 %v1140, 7
    %v1142 = vsub.s32 0, %v1141
    %v1143 = vrot.slane %v1138, %v1142
    %v1144 = vlaneseq
    %v1145 = vshrl.u32 %v1144, 7
    %v1146 = vsub.s32 1, %v1145
    %v1147 = vrot.slane %v1138, %v1146
    %v1150 = vadd.f32 %v1134, %v1143
    %v1151 = vadd.f32 %v1135, %v1147
    %v1152 = vadd.f32 %v1136, %v1143
    %v1153 = vadd.f32 %v1137, %v1147
    %v1154 = vmax.f32 %v1150, 0.0
    %v1155 = vmax.f32 %v1151, 0.0
    %v1156 = vmax.f32 %v1152, 0.0
    %v1157 = vmax.f32 %v1153, 0.0
    %v1158 = vpack.c.bf16 %v1156, %v1154
    %v1159 = vpack.c.bf16 %v1157, %v1155
    %1160 = vmatprep.subr.bf16.mxu0 %v1159
    %1161 = vmatpush1.bf16.msra.mxu0 %v1158
    %1162 = vmatprep.subr.bf16.mxu0 0
    %1163 = vmatpush1.bf16.msra.mxu0 0
    %1164 = vmatprep.subr.bf16.mxu0 0
    %1165 = vmatpush1.bf16.msra.mxu0 0
    %1166 = vmatprep.subr.bf16.mxu0 0
    %1167 = vmatpush1.bf16.msra.mxu0 0
    %1168 = vmatprep.subr.bf16.mxu0 0
    %1169 = vmatpush1.bf16.msra.mxu0 0
    %1170 = vmatprep.subr.bf16.mxu0 0
    %1171 = vmatpush1.bf16.msra.mxu0 0
    %1172 = vmatprep.subr.bf16.mxu0 0
    %1173 = vmatpush1.bf16.msra.mxu0 0
    %1174 = vmatprep.subr.bf16.mxu0 0
    %1175 = vmatpush1.bf16.msra.mxu0 0
    %1176 = vmatprep.subr.bf16.mxu0 0
    %1177 = vmatpush1.bf16.msra.mxu0 0
    %1178 = vmatprep.subr.bf16.mxu0 0
    %1179 = vmatpush1.bf16.msra.mxu0 0
    %1180 = vmatprep.subr.bf16.mxu0 0
    %1181 = vmatpush1.bf16.msra.mxu0 0
    %1182 = vmatprep.subr.bf16.mxu0 0
    %1183 = vmatpush1.bf16.msra.mxu0 0
    %1184 = vmatprep.subr.bf16.mxu0 0
    %1185 = vmatpush1.bf16.msra.mxu0 0
    %1186 = vmatprep.subr.bf16.mxu0 0
    %1187 = vmatpush1.bf16.msra.mxu0 0
    %1188 = vmatprep.subr.bf16.mxu0 0
    %1189 = vmatpush1.bf16.msra.mxu0 0
    %1190 = vmatprep.subr.bf16.mxu0 0
    %1191 = vmatpush1.bf16.msra.mxu0 0
    %1192 = vmatprep.mubr.bf16.mxu0 0
    %1193 = vmatmul.mubr.bf16.gmra.mrb[0].mxu0 %v280
    %v1194 = vpop.f32.mrb[0].mxu0
    %v1195 = vadd.f32 0.0, %v1194
    %v1196 = vpop.f32.mrb[0].mxu0
    %v1197 = vadd.f32 0.0, %v1196
    %v1198 = vpop.f32.mrb[0].mxu0
    %v1199 = vadd.f32 0.0, %v1198
    %v1200 = vpop.f32.mrb[0].mxu0
    %v1201 = vadd.f32 0.0, %v1200
    %1202 = vdwg.mxu0
    %1203 = vmatprep.subr.bf16.mxu0 %v1159
    %1204 = vmatpush1.bf16.msra.mxu0 %v1158
    %1205 = vmatprep.subr.bf16.mxu0 0
    %1206 = vmatpush1.bf16.msra.mxu0 0
    %1207 = vmatprep.subr.bf16.mxu0 0
    %1208 = vmatpush1.bf16.msra.mxu0 0
    %1209 = vmatprep.subr.bf16.mxu0 0
    %1210 = vmatpush1.bf16.msra.mxu0 0
    %1211 = vmatprep.subr.bf16.mxu0 0
    %1212 = vmatpush1.bf16.msra.mxu0 0
    %1213 = vmatprep.subr.bf16.mxu0 0
    %1214 = vmatpush1.bf16.msra.mxu0 0
    %1215 = vmatprep.subr.bf16.mxu0 0
    %1216 = vmatpush1.bf16.msra.mxu0 0
    %1217 = vmatprep.subr.bf16.mxu0 0
    %1218 = vmatpush1.bf16.msra.mxu0 0
    %1219 = vmatprep.subr.bf16.mxu0 0
    %1220 = vmatpush1.bf16.msra.mxu0 0
    %1221 = vmatprep.subr.bf16.mxu0 0
    %1222 = vmatpush1.bf16.msra.mxu0 0
    %1223 = vmatprep.subr.bf16.mxu0 0
    %1224 = vmatpush1.bf16.msra.mxu0 0
    %1225 = vmatprep.subr.bf16.mxu0 0
    %1226 = vmatpush1.bf16.msra.mxu0 0
    %1227 = vmatprep.subr.bf16.mxu0 0
    %1228 = vmatpush1.bf16.msra.mxu0 0
    %1229 = vmatprep.subr.bf16.mxu0 0
    %1230 = vmatpush1.bf16.msra.mxu0 0
    %1231 = vmatprep.subr.bf16.mxu0 0
    %1232 = vmatpush1.bf16.msra.mxu0 0
    %1233 = vmatprep.subr.bf16.mxu0 0
    %1234 = vmatpush1.bf16.msra.mxu0 0
    %1235 = vmatprep.mubr.bf16.mxu0 0
    %1236 = vmatmul.mubr.bf16.gmra.mrb[0].mxu0 %v370
    %v1237 = vpop.f32.mrb[0].mxu0
    %v1238 = vadd.f32 0.0, %v1237
    %v1239 = vpop.f32.mrb[0].mxu0
    %v1240 = vadd.f32 0.0, %v1239
    %v1241 = vpop.f32.mrb[0].mxu0
    %v1242 = vadd.f32 0.0, %v1241
    %v1243 = vpop.f32.mrb[0].mxu0
    %v1244 = vadd.f32 0.0, %v1243
    %1245 = vdwg.mxu0
    %v1246 = vmul.f32 %v1238, 2.0
    %v1247 = vmul.f32 %v1240, 2.0
    %v1248 = vmul.f32 %v1242, 2.0
    %v1249 = vmul.f32 %v1244, 2.0
    %v1250 = vsub.f32 %v1246, %v1154
    %v1251 = vsub.f32 %v1247, %v1155
    %v1252 = vsub.f32 %v1248, %v1156
    %v1253 = vsub.f32 %v1249, %v1157
    %s1254 = scalar_lea.vmem %s1, 768
    %v1255 = vld [vmem:[%s1254] sm:$0xff]
    %v1256 = vld [vmem:[%s1254 + $0x8] sm:$0xff]
    %v1257 = vld [vmem:[%s1254 + $0x10] sm:$0xff]
    %v1258 = vld [vmem:[%s1254 + $0x18] sm:$0xff]
    %v1259 = vld [vmem:[%s1254 + $0x20] sm:$0xff]
    %v1260 = vld [vmem:[%s1254 + $0x28] sm:$0xff]
    %v1261 = vld [vmem:[%s1254 + $0x30] sm:$0xff]
    %v1262 = vld [vmem:[%s1254 + $0x38] sm:$0xff]
    %v1263 = vld [vmem:[%s1254 + $0x40] sm:$0xff]
    %v1264 = vld [vmem:[%s1254 + $0x48] sm:$0xff]
    %v1265 = vld [vmem:[%s1254 + $0x50] sm:$0xff]
    %v1266 = vld [vmem:[%s1254 + $0x58] sm:$0xff]
    %v1267 = vld [vmem:[%s1254 + $0x60] sm:$0xff]
    %v1268 = vld [vmem:[%s1254 + $0x68] sm:$0xff]
    %v1269 = vld [vmem:[%s1254 + $0x70] sm:$0xff]
    %v1270 = vld [vmem:[%s1254 + $0x78] sm:$0xff]
    %v1271 = vld [vmem:[%s1254 + $0x80] sm:$0xff]
    %v1272 = vld [vmem:[%s1254 + $0x88] sm:$0xff]
    %v1273 = vld [vmem:[%s1254 + $0x90] sm:$0xff]
    %v1274 = vld [vmem:[%s1254 + $0x98] sm:$0xff]
    %v1275 = vld [vmem:[%s1254 + $0xa0] sm:$0xff]
    %v1276 = vld [vmem:[%s1254 + $0xa8] sm:$0xff]
    %v1277 = vld [vmem:[%s1254 + $0xb0] sm:$0xff]
    %v1278 = vld [vmem:[%s1254 + $0xb8] sm:$0xff]
    %v1279 = vld [vmem:[%s1254 + $0xc0] sm:$0xff]
    %v1280 = vld [vmem:[%s1254 + $0xc8] sm:$0xff]
    %v1281 = vld [vmem:[%s1254 + $0xd0] sm:$0xff]
    %v1282 = vld [vmem:[%s1254 + $0xd8] sm:$0xff]
    %v1283 = vld [vmem:[%s1254 + $0xe0] sm:$0xff]
    %v1284 = vld [vmem:[%s1254 + $0xe8] sm:$0xff]
    %v1285 = vld [vmem:[%s1254 + $0xf0] sm:$0xff]
    %v1286 = vld [vmem:[%s1254 + $0xf8] sm:$0xff]
    %v1287 = vpack.c.bf16 %v1199, %v1195
    %v1288 = vpack.c.bf16 %v1201, %v1197
    %s1289 = scalar_lea.vmem %s1, 1024
    %v1290 = vld [vmem:[%s1289] sm:$0xff]
    %v1291 = vld [vmem:[%s1289 + $0x8] sm:$0xff]
    %v1292 = vld [vmem:[%s1289 + $0x10] sm:$0xff]
    %v1293 = vld [vmem:[%s1289 + $0x18] sm:$0xff]
    %v1294 = vld [vmem:[%s1289 + $0x20] sm:$0xff]
    %v1295 = vld [vmem:[%s1289 + $0x28] sm:$0xff]
    %v1296 = vld [vmem:[%s1289 + $0x30] sm:$0xff]
    %v1297 = vld [vmem:[%s1289 + $0x38] sm:$0xff]
    %v1298 = vld [vmem:[%s1289 + $0x40] sm:$0xff]
    %v1299 = vld [vmem:[%s1289 + $0x48] sm:$0xff]
    %v1300 = vld [vmem:[%s1289 + $0x50] sm:$0xff]
    %v1301 = vld [vmem:[%s1289 + $0x58] sm:$0xff]
    %v1302 = vld [vmem:[%s1289 + $0x60] sm:$0xff]
    %v1303 = vld [vmem:[%s1289 + $0x68] sm:$0xff]
    %v1304 = vld [vmem:[%s1289 + $0x70] sm:$0xff]
    %v1305 = vld [vmem:[%s1289 + $0x78] sm:$0xff]
    %v1306 = vld [vmem:[%s1289 + $0x80] sm:$0xff]
    %v1307 = vld [vmem:[%s1289 + $0x88] sm:$0xff]
    %v1308 = vld [vmem:[%s1289 + $0x90] sm:$0xff]
    %v1309 = vld [vmem:[%s1289 + $0x98] sm:$0xff]
    %v1310 = vld [vmem:[%s1289 + $0xa0] sm:$0xff]
    %v1311 = vld [vmem:[%s1289 + $0xa8] sm:$0xff]
    %v1312 = vld [vmem:[%s1289 + $0xb0] sm:$0xff]
    %v1313 = vld [vmem:[%s1289 + $0xb8] sm:$0xff]
    %v1314 = vld [vmem:[%s1289 + $0xc0] sm:$0xff]
    %v1315 = vld [vmem:[%s1289 + $0xc8] sm:$0xff]
    %v1316 = vld [vmem:[%s1289 + $0xd0] sm:$0xff]
    %v1317 = vld [vmem:[%s1289 + $0xd8] sm:$0xff]
    %v1318 = vld [vmem:[%s1289 + $0xe0] sm:$0xff]
    %v1319 = vld [vmem:[%s1289 + $0xe8] sm:$0xff]
    %v1320 = vld [vmem:[%s1289 + $0xf0] sm:$0xff]
    %v1321 = vld [vmem:[%s1289 + $0xf8] sm:$0xff]
    %v1354 = vunpack.c.l.b16 %v1290
    %v1355 = vunpack.c.h.b16 %v1290
    %v1356 = vunpack.c.l.b16 %v1291
    %v1357 = vunpack.c.h.b16 %v1291
    %v1358 = vunpack.c.l.b16 %v1292
    %v1359 = vunpack.c.h.b16 %v1292
    %v1360 = vunpack.c.l.b16 %v1293
    %v1361 = vunpack.c.h.b16 %v1293
    %v1362 = vunpack.c.l.b16 %v1294
    %v1363 = vunpack.c.h.b16 %v1294
    %v1364 = vunpack.c.l.b16 %v1295
    %v1365 = vunpack.c.h.b16 %v1295
    %v1366 = vunpack.c.l.b16 %v1296
    %v1367 = vunpack.c.h.b16 %v1296
    %v1368 = vunpack.c.l.b16 %v1297
    %v1369 = vunpack.c.h.b16 %v1297
    %v1370 = vunpack.c.l.b16 %v1298
    %v1371 = vunpack.c.h.b16 %v1298
    %v1372 = vunpack.c.l.b16 %v1299
    %v1373 = vunpack.c.h.b16 %v1299
    %v1374 = vunpack.c.l.b16 %v1300
    %v1375 = vunpack.c.h.b16 %v1300
    %v1376 = vunpack.c.l.b16 %v1301
    %v1377 = vunpack.c.h.b16 %v1301
    %v1378 = vunpack.c.l.b16 %v1302
    %v1379 = vunpack.c.h.b16 %v1302
    %v1380 = vunpack.c.l.b16 %v1303
    %v1381 = vunpack.c.h.b16 %v1303
    %v1382 = vunpack.c.l.b16 %v1304
    %v1383 = vunpack.c.h.b16 %v1304
    %v1384 = vunpack.c.l.b16 %v1305
    %v1385 = vunpack.c.h.b16 %v1305
    %v1386 = vunpack.c.l.b16 %v1306
    %v1387 = vunpack.c.h.b16 %v1306
    %v1388 = vunpack.c.l.b16 %v1307
    %v1389 = vunpack.c.h.b16 %v1307
    %v1390 = vunpack.c.l.b16 %v1308
    %v1391 = vunpack.c.h.b16 %v1308
    %v1392 = vunpack.c.l.b16 %v1309
    %v1393 = vunpack.c.h.b16 %v1309
    %v1394 = vunpack.c.l.b16 %v1310
    %v1395 = vunpack.c.h.b16 %v1310
    %v1396 = vunpack.c.l.b16 %v1311
    %v1397 = vunpack.c.h.b16 %v1311
    %v1398 = vunpack.c.l.b16 %v1312
    %v1399 = vunpack.c.h.b16 %v1312
    %v1400 = vunpack.c.l.b16 %v1313
    %v1401 = vunpack.c.h.b16 %v1313
    %v1402 = vunpack.c.l.b16 %v1314
    %v1403 = vunpack.c.h.b16 %v1314
    %v1404 = vunpack.c.l.b16 %v1315
    %v1405 = vunpack.c.h.b16 %v1315
    %v1406 = vunpack.c.l.b16 %v1316
    %v1407 = vunpack.c.h.b16 %v1316
    %v1408 = vunpack.c.l.b16 %v1317
    %v1409 = vunpack.c.h.b16 %v1317
    %v1410 = vunpack.c.l.b16 %v1318
    %v1411 = vunpack.c.h.b16 %v1318
    %v1412 = vunpack.c.l.b16 %v1319
    %v1413 = vunpack.c.h.b16 %v1319
    %v1414 = vunpack.c.l.b16 %v1320
    %v1415 = vunpack.c.h.b16 %v1320
    %v1416 = vunpack.c.l.b16 %v1321
    %v1417 = vunpack.c.h.b16 %v1321
    %v1418 = vpack.c.b16 %v1356, %v1354
    %v1419 = vpack.c.b16 %v1357, %v1355
    %v1420 = vpack.c.b16 %v1360, %v1358
    %v1421 = vpack.c.b16 %v1361, %v1359
    %v1422 = vpack.c.b16 %v1364, %v1362
    %v1423 = vpack.c.b16 %v1365, %v1363
    %v1424 = vpack.c.b16 %v1368, %v1366
    %v1425 = vpack.c.b16 %v1369, %v1367
    %v1426 = vpack.c.b16 %v1372, %v1370
    %v1427 = vpack.c.b16 %v1373, %v1371
    %v1428 = vpack.c.b16 %v1376, %v1374
    %v1429 = vpack.c.b16 %v1377, %v1375
    %v1430 = vpack.c.b16 %v1380, %v1378
    %v1431 = vpack.c.b16 %v1381, %v1379
    %v1432 = vpack.c.b16 %v1384, %v1382
    %v1433 = vpack.c.b16 %v1385, %v1383
    %v1434 = vpack.c.b16 %v1388, %v1386
    %v1435 = vpack.c.b16 %v1389, %v1387
    %v1436 = vpack.c.b16 %v1392, %v1390
    %v1437 = vpack.c.b16 %v1393, %v1391
    %v1438 = vpack.c.b16 %v1396, %v1394
    %v1439 = vpack.c.b16 %v1397, %v1395
    %v1440 = vpack.c.b16 %v1400, %v1398
    %v1441 = vpack.c.b16 %v1401, %v1399
    %v1442 = vpack.c.b16 %v1404, %v1402
    %v1443 = vpack.c.b16 %v1405, %v1403
    %v1444 = vpack.c.b16 %v1408, %v1406
    %v1445 = vpack.c.b16 %v1409, %v1407
    %v1446 = vpack.c.b16 %v1412, %v1410
    %v1447 = vpack.c.b16 %v1413, %v1411
    %v1448 = vpack.c.b16 %v1416, %v1414
    %v1449 = vpack.c.b16 %v1417, %v1415
    %1482 = vmatprep.subr.bf16.mxu0 %v1419
    %1483 = vmatpush1.bf16.msra.mxu0 %v1418
    %1484 = vmatprep.subr.bf16.mxu0 %v1421
    %1485 = vmatpush1.bf16.msra.mxu0 %v1420
    %1486 = vmatprep.subr.bf16.mxu0 %v1423
    %1487 = vmatpush1.bf16.msra.mxu0 %v1422
    %1488 = vmatprep.subr.bf16.mxu0 %v1425
    %1489 = vmatpush1.bf16.msra.mxu0 %v1424
    %1490 = vmatprep.subr.bf16.mxu0 %v1427
    %1491 = vmatpush1.bf16.msra.mxu0 %v1426
    %1492 = vmatprep.subr.bf16.mxu0 %v1429
    %1493 = vmatpush1.bf16.msra.mxu0 %v1428
    %1494 = vmatprep.subr.bf16.mxu0 %v1431
    %1495 = vmatpush1.bf16.msra.mxu0 %v1430
    %1496 = vmatprep.subr.bf16.mxu0 %v1433
    %1497 = vmatpush1.bf16.msra.mxu0 %v1432
    %1498 = vmatprep.subr.bf16.mxu0 %v1435
    %1499 = vmatpush1.bf16.msra.mxu0 %v1434
    %1500 = vmatprep.subr.bf16.mxu0 %v1437
    %1501 = vmatpush1.bf16.msra.mxu0 %v1436
    %1502 = vmatprep.subr.bf16.mxu0 %v1439
    %1503 = vmatpush1.bf16.msra.mxu0 %v1438
    %1504 = vmatprep.subr.bf16.mxu0 %v1441
    %1505 = vmatpush1.bf16.msra.mxu0 %v1440
    %1506 = vmatprep.subr.bf16.mxu0 %v1443
    %1507 = vmatpush1.bf16.msra.mxu0 %v1442
    %1508 = vmatprep.subr.bf16.mxu0 %v1445
    %1509 = vmatpush1.bf16.msra.mxu0 %v1444
    %1510 = vmatprep.subr.bf16.mxu0 %v1447
    %1511 = vmatpush1.bf16.msra.mxu0 %v1446
    %1512 = vmatprep.subr.bf16.mxu0 %v1449
    %1513 = vmatpush1.bf16.msra.mxu0 %v1448
    %1514 = vmatprep.mubr.bf16.mxu0 %v1288
    %1515 = vmatmul.mubr.bf16.gmra.mrb[0].mxu0 %v1287
    %v1516 = vpop.f32.mrb[0].mxu0
    %v1517 = vadd.f32 0.0, %v1516
    %v1518 = vpop.f32.mrb[0].mxu0
    %v1519 = vadd.f32 0.0, %v1518
    %v1520 = vpop.f32.mrb[0].mxu0
    %v1521 = vadd.f32 0.0, %v1520
    %v1522 = vpop.f32.mrb[0].mxu0
    %v1523 = vadd.f32 0.0, %v1522
    %1524 = vdwg.mxu0
    %v1557 = vunpack.c.l.b16 %v1255
    %v1558 = vunpack.c.h.b16 %v1255
    %v1559 = vunpack.c.l.b16 %v1256
    %v1560 = vunpack.c.h.b16 %v1256
    %v1561 = vunpack.c.l.b16 %v1257
    %v1562 = vunpack.c.h.b16 %v1257
    %v1563 = vunpack.c.l.b16 %v1258
    %v1564 = vunpack.c.h.b16 %v1258
    %v1565 = vunpack.c.l.b16 %v1259
    %v1566 = vunpack.c.h.b16 %v1259
    %v1567 = vunpack.c.l.b16 %v1260
    %v1568 = vunpack.c.h.b16 %v1260
    %v1569 = vunpack.c.l.b16 %v1261
    %v1570 = vunpack.c.h.b16 %v1261
    %v1571 = vunpack.c.l.b16 %v1262
    %v1572 = vunpack.c.h.b16 %v1262
    %v1573 = vunpack.c.l.b16 %v1263
    %v1574 = vunpack.c.h.b16 %v1263
    %v1575 = vunpack.c.l.b16 %v1264
    %v1576 = vunpack.c.h.b16 %v1264
    %v1577 = vunpack.c.l.b16 %v1265
    %v1578 = vunpack.c.h.b16 %v1265
    %v1579 = vunpack.c.l.b16 %v1266
    %v1580 = vunpack.c.h.b16 %v1266
    %v1581 = vunpack.c.l.b16 %v1267
    %v1582 = vunpack.c.h.b16 %v1267
    %v1583 = vunpack.c.l.b16 %v1268
    %v1584 = vunpack.c.h.b16 %v1268
    %v1585 = vunpack.c.l.b16 %v1269
    %v1586 = vunpack.c.h.b16 %v1269
    %v1587 = vunpack.c.l.b16 %v1270
    %v1588 = vunpack.c.h.b16 %v1270
    %v1589 = vunpack.c.l.b16 %v1271
    %v1590 = vunpack.c.h.b16 %v1271
    %v1591 = vunpack.c.l.b16 %v1272
    %v1592 = vunpack.c.h.b16 %v1272
    %v1593 = vunpack.c.l.b16 %v1273
    %v1594 = vunpack.c.h.b16 %v1273
    %v1595 = vunpack.c.l.b16 %v1274
    %v1596 = vunpack.c.h.b16 %v1274
    %v1597 = vunpack.c.l.b16 %v1275
    %v1598 = vunpack.c.h.b16 %v1275
    %v1599 = vunpack.c.l.b16 %v1276
    %v1600 = vunpack.c.h.b16 %v1276
    %v1601 = vunpack.c.l.b16 %v1277
    %v1602 = vunpack.c.h.b16 %v1277
    %v1603 = vunpack.c.l.b16 %v1278
    %v1604 = vunpack.c.h.b16 %v1278
    %v1605 = vunpack.c.l.b16 %v1279
    %v1606 = vunpack.c.h.b16 %v1279
    %v1607 = vunpack.c.l.b16 %v1280
    %v1608 = vunpack.c.h.b16 %v1280
    %v1609 = vunpack.c.l.b16 %v1281
    %v1610 = vunpack.c.h.b16 %v1281
    %v1611 = vunpack.c.l.b16 %v1282
    %v1612 = vunpack.c.h.b16 %v1282
    %v1613 = vunpack.c.l.b16 %v1283
    %v1614 = vunpack.c.h.b16 %v1283
    %v1615 = vunpack.c.l.b16 %v1284
    %v1616 = vunpack.c.h.b16 %v1284
    %v1617 = vunpack.c.l.b16 %v1285
    %v1618 = vunpack.c.h.b16 %v1285
    %v1619 = vunpack.c.l.b16 %v1286
    %v1620 = vunpack.c.h.b16 %v1286
    %v1621 = vpack.c.b16 %v1559, %v1557
    %v1622 = vpack.c.b16 %v1560, %v1558
    %v1623 = vpack.c.b16 %v1563, %v1561
    %v1624 = vpack.c.b16 %v1564, %v1562
    %v1625 = vpack.c.b16 %v1567, %v1565
    %v1626 = vpack.c.b16 %v1568, %v1566
    %v1627 = vpack.c.b16 %v1571, %v1569
    %v1628 = vpack.c.b16 %v1572, %v1570
    %v1629 = vpack.c.b16 %v1575, %v1573
    %v1630 = vpack.c.b16 %v1576, %v1574
    %v1631 = vpack.c.b16 %v1579, %v1577
    %v1632 = vpack.c.b16 %v1580, %v1578
    %v1633 = vpack.c.b16 %v1583, %v1581
    %v1634 = vpack.c.b16 %v1584, %v1582
    %v1635 = vpack.c.b16 %v1587, %v1585
    %v1636 = vpack.c.b16 %v1588, %v1586
    %v1637 = vpack.c.b16 %v1591, %v1589
    %v1638 = vpack.c.b16 %v1592, %v1590
    %v1639 = vpack.c.b16 %v1595, %v1593
    %v1640 = vpack.c.b16 %v1596, %v1594
    %v1641 = vpack.c.b16 %v1599, %v1597
    %v1642 = vpack.c.b16 %v1600, %v1598
    %v1643 = vpack.c.b16 %v1603, %v1601
    %v1644 = vpack.c.b16 %v1604, %v1602
    %v1645 = vpack.c.b16 %v1607, %v1605
    %v1646 = vpack.c.b16 %v1608, %v1606
    %v1647 = vpack.c.b16 %v1611, %v1609
    %v1648 = vpack.c.b16 %v1612, %v1610
    %v1649 = vpack.c.b16 %v1615, %v1613
    %v1650 = vpack.c.b16 %v1616, %v1614
    %v1651 = vpack.c.b16 %v1619, %v1617
    %v1652 = vpack.c.b16 %v1620, %v1618
    %1685 = vmatprep.subr.bf16.mxu0 %v1622
    %1686 = vmatpush1.bf16.msra.mxu0 %v1621
    %1687 = vmatprep.subr.bf16.mxu0 %v1624
    %1688 = vmatpush1.bf16.msra.mxu0 %v1623
    %1689 = vmatprep.subr.bf16.mxu0 %v1626
    %1690 = vmatpush1.bf16.msra.mxu0 %v1625
    %1691 = vmatprep.subr.bf16.mxu0 %v1628
    %1692 = vmatpush1.bf16.msra.mxu0 %v1627
    %1693 = vmatprep.subr.bf16.mxu0 %v1630
    %1694 = vmatpush1.bf16.msra.mxu0 %v1629
    %1695 = vmatprep.subr.bf16.mxu0 %v1632
    %1696 = vmatpush1.bf16.msra.mxu0 %v1631
    %1697 = vmatprep.subr.bf16.mxu0 %v1634
    %1698 = vmatpush1.bf16.msra.mxu0 %v1633
    %1699 = vmatprep.subr.bf16.mxu0 %v1636
    %1700 = vmatpush1.bf16.msra.mxu0 %v1635
    %1701 = vmatprep.subr.bf16.mxu0 %v1638
    %1702 = vmatpush1.bf16.msra.mxu0 %v1637
    %1703 = vmatprep.subr.bf16.mxu0 %v1640
    %1704 = vmatpush1.bf16.msra.mxu0 %v1639
    %1705 = vmatprep.subr.bf16.mxu0 %v1642
    %1706 = vmatpush1.bf16.msra.mxu0 %v1641
    %1707 = vmatprep.subr.bf16.mxu0 %v1644
    %1708 = vmatpush1.bf16.msra.mxu0 %v1643
    %1709 = vmatprep.subr.bf16.mxu0 %v1646
    %1710 = vmatpush1.bf16.msra.mxu0 %v1645
    %1711 = vmatprep.subr.bf16.mxu0 %v1648
    %1712 = vmatpush1.bf16.msra.mxu0 %v1647
    %1713 = vmatprep.subr.bf16.mxu0 %v1650
    %1714 = vmatpush1.bf16.msra.mxu0 %v1649
    %1715 = vmatprep.subr.bf16.mxu0 %v1652
    %1716 = vmatpush1.bf16.msra.mxu0 %v1651
    %1717 = vmatprep.mubr.bf16.mxu0 %v1159
    %1718 = vmatmul.mubr.bf16.gmra.mrb[0].mxu0 %v1158
    %v1719 = vpop.f32.mrb[0].mxu0
    %v1720 = vadd.f32 %v1517, %v1719
    %v1721 = vpop.f32.mrb[0].mxu0
    %v1722 = vadd.f32 %v1519, %v1721
    %v1723 = vpop.f32.mrb[0].mxu0
    %v1724 = vadd.f32 %v1521, %v1723
    %v1725 = vpop.f32.mrb[0].mxu0
    %v1726 = vadd.f32 %v1523, %v1725
    %1727 = vdwg.mxu0
    %v1728 = vpack.c.bf16 %v1252, %v1250
    %v1729 = vpack.c.bf16 %v1253, %v1251
    %s1730 = scalar_lea.vmem %s1, 1280
    %v1731 = vld [vmem:[%s1730] sm:$0xff]
    %v1732 = vld [vmem:[%s1730 + $0x8] sm:$0xff]
    %v1733 = vld [vmem:[%s1730 + $0x10] sm:$0xff]
    %v1734 = vld [vmem:[%s1730 + $0x18] sm:$0xff]
    %v1735 = vld [vmem:[%s1730 + $0x20] sm:$0xff]
    %v1736 = vld [vmem:[%s1730 + $0x28] sm:$0xff]
    %v1737 = vld [vmem:[%s1730 + $0x30] sm:$0xff]
    %v1738 = vld [vmem:[%s1730 + $0x38] sm:$0xff]
    %v1739 = vld [vmem:[%s1730 + $0x40] sm:$0xff]
    %v1740 = vld [vmem:[%s1730 + $0x48] sm:$0xff]
    %v1741 = vld [vmem:[%s1730 + $0x50] sm:$0xff]
    %v1742 = vld [vmem:[%s1730 + $0x58] sm:$0xff]
    %v1743 = vld [vmem:[%s1730 + $0x60] sm:$0xff]
    %v1744 = vld [vmem:[%s1730 + $0x68] sm:$0xff]
    %v1745 = vld [vmem:[%s1730 + $0x70] sm:$0xff]
    %v1746 = vld [vmem:[%s1730 + $0x78] sm:$0xff]
    %v1747 = vld [vmem:[%s1730 + $0x80] sm:$0xff]
    %v1748 = vld [vmem:[%s1730 + $0x88] sm:$0xff]
    %v1749 = vld [vmem:[%s1730 + $0x90] sm:$0xff]
    %v1750 = vld [vmem:[%s1730 + $0x98] sm:$0xff]
    %v1751 = vld [vmem:[%s1730 + $0xa0] sm:$0xff]
    %v1752 = vld [vmem:[%s1730 + $0xa8] sm:$0xff]
    %v1753 = vld [vmem:[%s1730 + $0xb0] sm:$0xff]
    %v1754 = vld [vmem:[%s1730 + $0xb8] sm:$0xff]
    %v1755 = vld [vmem:[%s1730 + $0xc0] sm:$0xff]
    %v1756 = vld [vmem:[%s1730 + $0xc8] sm:$0xff]
    %v1757 = vld [vmem:[%s1730 + $0xd0] sm:$0xff]
    %v1758 = vld [vmem:[%s1730 + $0xd8] sm:$0xff]
    %v1759 = vld [vmem:[%s1730 + $0xe0] sm:$0xff]
    %v1760 = vld [vmem:[%s1730 + $0xe8] sm:$0xff]
    %v1761 = vld [vmem:[%s1730 + $0xf0] sm:$0xff]
    %v1762 = vld [vmem:[%s1730 + $0xf8] sm:$0xff]
    %v1795 = vunpack.c.l.b16 %v1731
    %v1796 = vunpack.c.h.b16 %v1731
    %v1797 = vunpack.c.l.b16 %v1732
    %v1798 = vunpack.c.h.b16 %v1732
    %v1799 = vunpack.c.l.b16 %v1733
    %v1800 = vunpack.c.h.b16 %v1733
    %v1801 = vunpack.c.l.b16 %v1734
    %v1802 = vunpack.c.h.b16 %v1734
    %v1803 = vunpack.c.l.b16 %v1735
    %v1804 = vunpack.c.h.b16 %v1735
    %v1805 = vunpack.c.l.b16 %v1736
    %v1806 = vunpack.c.h.b16 %v1736
    %v1807 = vunpack.c.l.b16 %v1737
    %v1808 = vunpack.c.h.b16 %v1737
    %v1809 = vunpack.c.l.b16 %v1738
    %v1810 = vunpack.c.h.b16 %v1738
    %v1811 = vunpack.c.l.b16 %v1739
    %v1812 = vunpack.c.h.b16 %v1739
    %v1813 = vunpack.c.l.b16 %v1740
    %v1814 = vunpack.c.h.b16 %v1740
    %v1815 = vunpack.c.l.b16 %v1741
    %v1816 = vunpack.c.h.b16 %v1741
    %v1817 = vunpack.c.l.b16 %v1742
    %v1818 = vunpack.c.h.b16 %v1742
    %v1819 = vunpack.c.l.b16 %v1743
    %v1820 = vunpack.c.h.b16 %v1743
    %v1821 = vunpack.c.l.b16 %v1744
    %v1822 = vunpack.c.h.b16 %v1744
    %v1823 = vunpack.c.l.b16 %v1745
    %v1824 = vunpack.c.h.b16 %v1745
    %v1825 = vunpack.c.l.b16 %v1746
    %v1826 = vunpack.c.h.b16 %v1746
    %v1827 = vunpack.c.l.b16 %v1747
    %v1828 = vunpack.c.h.b16 %v1747
    %v1829 = vunpack.c.l.b16 %v1748
    %v1830 = vunpack.c.h.b16 %v1748
    %v1831 = vunpack.c.l.b16 %v1749
    %v1832 = vunpack.c.h.b16 %v1749
    %v1833 = vunpack.c.l.b16 %v1750
    %v1834 = vunpack.c.h.b16 %v1750
    %v1835 = vunpack.c.l.b16 %v1751
    %v1836 = vunpack.c.h.b16 %v1751
    %v1837 = vunpack.c.l.b16 %v1752
    %v1838 = vunpack.c.h.b16 %v1752
    %v1839 = vunpack.c.l.b16 %v1753
    %v1840 = vunpack.c.h.b16 %v1753
    %v1841 = vunpack.c.l.b16 %v1754
    %v1842 = vunpack.c.h.b16 %v1754
    %v1843 = vunpack.c.l.b16 %v1755
    %v1844 = vunpack.c.h.b16 %v1755
    %v1845 = vunpack.c.l.b16 %v1756
    %v1846 = vunpack.c.h.b16 %v1756
    %v1847 = vunpack.c.l.b16 %v1757
    %v1848 = vunpack.c.h.b16 %v1757
    %v1849 = vunpack.c.l.b16 %v1758
    %v1850 = vunpack.c.h.b16 %v1758
    %v1851 = vunpack.c.l.b16 %v1759
    %v1852 = vunpack.c.h.b16 %v1759
    %v1853 = vunpack.c.l.b16 %v1760
    %v1854 = vunpack.c.h.b16 %v1760
    %v1855 = vunpack.c.l.b16 %v1761
    %v1856 = vunpack.c.h.b16 %v1761
    %v1857 = vunpack.c.l.b16 %v1762
    %v1858 = vunpack.c.h.b16 %v1762
    %v1859 = vpack.c.b16 %v1797, %v1795
    %v1860 = vpack.c.b16 %v1798, %v1796
    %v1861 = vpack.c.b16 %v1801, %v1799
    %v1862 = vpack.c.b16 %v1802, %v1800
    %v1863 = vpack.c.b16 %v1805, %v1803
    %v1864 = vpack.c.b16 %v1806, %v1804
    %v1865 = vpack.c.b16 %v1809, %v1807
    %v1866 = vpack.c.b16 %v1810, %v1808
    %v1867 = vpack.c.b16 %v1813, %v1811
    %v1868 = vpack.c.b16 %v1814, %v1812
    %v1869 = vpack.c.b16 %v1817, %v1815
    %v1870 = vpack.c.b16 %v1818, %v1816
    %v1871 = vpack.c.b16 %v1821, %v1819
    %v1872 = vpack.c.b16 %v1822, %v1820
    %v1873 = vpack.c.b16 %v1825, %v1823
    %v1874 = vpack.c.b16 %v1826, %v1824
    %v1875 = vpack.c.b16 %v1829, %v1827
    %v1876 = vpack.c.b16 %v1830, %v1828
    %v1877 = vpack.c.b16 %v1833, %v1831
    %v1878 = vpack.c.b16 %v1834, %v1832
    %v1879 = vpack.c.b16 %v1837, %v1835
    %v1880 = vpack.c.b16 %v1838, %v1836
    %v1881 = vpack.c.b16 %v1841, %v1839
    %v1882 = vpack.c.b16 %v1842, %v1840
    %v1883 = vpack.c.b16 %v1845, %v1843
    %v1884 = vpack.c.b16 %v1846, %v1844
    %v1885 = vpack.c.b16 %v1849, %v1847
    %v1886 = vpack.c.b16 %v1850, %v1848
    %v1887 = vpack.c.b16 %v1853, %v1851
    %v1888 = vpack.c.b16 %v1854, %v1852
    %v1889 = vpack.c.b16 %v1857, %v1855
    %v1890 = vpack.c.b16 %v1858, %v1856
    %1923 = vmatprep.subr.bf16.mxu0 %v1860
    %1924 = vmatpush1.bf16.msra.mxu0 %v1859
    %1925 = vmatprep.subr.bf16.mxu0 %v1862
    %1926 = vmatpush1.bf16.msra.mxu0 %v1861
    %1927 = vmatprep.subr.bf16.mxu0 %v1864
    %1928 = vmatpush1.bf16.msra.mxu0 %v1863
    %1929 = vmatprep.subr.bf16.mxu0 %v1866
    %1930 = vmatpush1.bf16.msra.mxu0 %v1865
    %1931 = vmatprep.subr.bf16.mxu0 %v1868
    %1932 = vmatpush1.bf16.msra.mxu0 %v1867
    %1933 = vmatprep.subr.bf16.mxu0 %v1870
    %1934 = vmatpush1.bf16.msra.mxu0 %v1869
    %1935 = vmatprep.subr.bf16.mxu0 %v1872
    %1936 = vmatpush1.bf16.msra.mxu0 %v1871
    %1937 = vmatprep.subr.bf16.mxu0 %v1874
    %1938 = vmatpush1.bf16.msra.mxu0 %v1873
    %1939 = vmatprep.subr.bf16.mxu0 %v1876
    %1940 = vmatpush1.bf16.msra.mxu0 %v1875
    %1941 = vmatprep.subr.bf16.mxu0 %v1878
    %1942 = vmatpush1.bf16.msra.mxu0 %v1877
    %1943 = vmatprep.subr.bf16.mxu0 %v1880
    %1944 = vmatpush1.bf16.msra.mxu0 %v1879
    %1945 = vmatprep.subr.bf16.mxu0 %v1882
    %1946 = vmatpush1.bf16.msra.mxu0 %v1881
    %1947 = vmatprep.subr.bf16.mxu0 %v1884
    %1948 = vmatpush1.bf16.msra.mxu0 %v1883
    %1949 = vmatprep.subr.bf16.mxu0 %v1886
    %1950 = vmatpush1.bf16.msra.mxu0 %v1885
    %1951 = vmatprep.subr.bf16.mxu0 %v1888
    %1952 = vmatpush1.bf16.msra.mxu0 %v1887
    %1953 = vmatprep.subr.bf16.mxu0 %v1890
    %1954 = vmatpush1.bf16.msra.mxu0 %v1889
    %1955 = vmatprep.mubr.bf16.mxu0 %v1729
    %1956 = vmatmul.mubr.bf16.gmra.mrb[0].mxu0 %v1728
    %v1957 = vpop.f32.mrb[0].mxu0
    %v1958 = vadd.f32 0.0, %v1957
    %v1959 = vpop.f32.mrb[0].mxu0
    %v1960 = vadd.f32 0.0, %v1959
    %v1961 = vpop.f32.mrb[0].mxu0
    %v1962 = vadd.f32 0.0, %v1961
    %v1963 = vpop.f32.mrb[0].mxu0
    %v1964 = vadd.f32 0.0, %v1963
    %1965 = vdwg.mxu0
    %v1966 = vadd.f32 %v1720, %v1958
    %v1967 = vadd.f32 %v1722, %v1960
    %v1968 = vadd.f32 %v1724, %v1962
    %v1969 = vadd.f32 %v1726, %v1964
    %s1970 = scalar_lea.vmem %s2, 2
    %v1971 = vld [vmem:[%s1970] sm:$0x3]
    %v1973 = vlaneseq
    %v1974 = vshrl.u32 %v1973, 7
    %v1975 = vsub.s32 0, %v1974
    %v1976 = vrot.slane %v1971, %v1975
    %v1977 = vlaneseq
    %v1978 = vshrl.u32 %v1977, 7
    %v1979 = vsub.s32 1, %v1978
    %v1980 = vrot.slane %v1971, %v1979
    %v1983 = vadd.f32 %v1966, %v1976
    %v1984 = vadd.f32 %v1967, %v1980
    %v1985 = vadd.f32 %v1968, %v1976
    %v1986 = vadd.f32 %v1969, %v1980
    %v1987 = vmax.f32 %v1983, 0.0
    %v1988 = vmax.f32 %v1984, 0.0
    %v1989 = vmax.f32 %v1985, 0.0
    %v1990 = vmax.f32 %v1986, 0.0
    %v1991 = vpack.c.bf16 %v1989, %v1987
    %v1992 = vpack.c.bf16 %v1990, %v1988
    %1993 = vmatprep.subr.bf16.mxu0 %v1992
    %1994 = vmatpush1.bf16.msra.mxu0 %v1991
    %1995 = vmatprep.subr.bf16.mxu0 0
    %1996 = vmatpush1.bf16.msra.mxu0 0
    %1997 = vmatprep.subr.bf16.mxu0 0
    %1998 = vmatpush1.bf16.msra.mxu0 0
    %1999 = vmatprep.subr.bf16.mxu0 0
    %2000 = vmatpush1.bf16.msra.mxu0 0
    %2001 = vmatprep.subr.bf16.mxu0 0
    %2002 = vmatpush1.bf16.msra.mxu0 0
    %2003 = vmatprep.subr.bf16.mxu0 0
    %2004 = vmatpush1.bf16.msra.mxu0 0
    %2005 = vmatprep.subr.bf16.mxu0 0
    %2006 = vmatpush1.bf16.msra.mxu0 0
    %2007 = vmatprep.subr.bf16.mxu0 0
    %2008 = vmatpush1.bf16.msra.mxu0 0
    %2009 = vmatprep.subr.bf16.mxu0 0
    %2010 = vmatpush1.bf16.msra.mxu0 0
    %2011 = vmatprep.subr.bf16.mxu0 0
    %2012 = vmatpush1.bf16.msra.mxu0 0
    %2013 = vmatprep.subr.bf16.mxu0 0
    %2014 = vmatpush1.bf16.msra.mxu0 0
    %2015 = vmatprep.subr.bf16.mxu0 0
    %2016 = vmatpush1.bf16.msra.mxu0 0
    %2017 = vmatprep.subr.bf16.mxu0 0
    %2018 = vmatpush1.bf16.msra.mxu0 0
    %2019 = vmatprep.subr.bf16.mxu0 0
    %2020 = vmatpush1.bf16.msra.mxu0 0
    %2021 = vmatprep.subr.bf16.mxu0 0
    %2022 = vmatpush1.bf16.msra.mxu0 0
    %2023 = vmatprep.subr.bf16.mxu0 0
    %2024 = vmatpush1.bf16.msra.mxu0 0
    %2025 = vmatprep.mubr.bf16.mxu0 0
    %2026 = vmatmul.mubr.bf16.gmra.mrb[0].mxu0 %v280
    %v2027 = vpop.f32.mrb[0].mxu0
    %v2028 = vadd.f32 0.0, %v2027
    %v2029 = vpop.f32.mrb[0].mxu0
    %v2030 = vadd.f32 0.0, %v2029
    %v2031 = vpop.f32.mrb[0].mxu0
    %v2032 = vadd.f32 0.0, %v2031
    %v2033 = vpop.f32.mrb[0].mxu0
    %v2034 = vadd.f32 0.0, %v2033
    %2035 = vdwg.mxu0
    %2036 = vmatprep.subr.bf16.mxu0 %v1992
    %2037 = vmatpush1.bf16.msra.mxu0 %v1991
    %2038 = vmatprep.subr.bf16.mxu0 0
    %2039 = vmatpush1.bf16.msra.mxu0 0
    %2040 = vmatprep.subr.bf16.mxu0 0
    %2041 = vmatpush1.bf16.msra.mxu0 0
    %2042 = vmatprep.subr.bf16.mxu0 0
    %2043 = vmatpush1.bf16.msra.mxu0 0
    %2044 = vmatprep.subr.bf16.mxu0 0
    %2045 = vmatpush1.bf16.msra.mxu0 0
    %2046 = vmatprep.subr.bf16.mxu0 0
    %2047 = vmatpush1.bf16.msra.mxu0 0
    %2048 = vmatprep.subr.bf16.mxu0 0
    %2049 = vmatpush1.bf16.msra.mxu0 0
    %2050 = vmatprep.subr.bf16.mxu0 0
    %2051 = vmatpush1.bf16.msra.mxu0 0
    %2052 = vmatprep.subr.bf16.mxu0 0
    %2053 = vmatpush1.bf16.msra.mxu0 0
    %2054 = vmatprep.subr.bf16.mxu0 0
    %2055 = vmatpush1.bf16.msra.mxu0 0
    %2056 = vmatprep.subr.bf16.mxu0 0
    %2057 = vmatpush1.bf16.msra.mxu0 0
    %2058 = vmatprep.subr.bf16.mxu0 0
    %2059 = vmatpush1.bf16.msra.mxu0 0
    %2060 = vmatprep.subr.bf16.mxu0 0
    %2061 = vmatpush1.bf16.msra.mxu0 0
    %2062 = vmatprep.subr.bf16.mxu0 0
    %2063 = vmatpush1.bf16.msra.mxu0 0
    %2064 = vmatprep.subr.bf16.mxu0 0
    %2065 = vmatpush1.bf16.msra.mxu0 0
    %2066 = vmatprep.subr.bf16.mxu0 0
    %2067 = vmatpush1.bf16.msra.mxu0 0
    %2068 = vmatprep.mubr.bf16.mxu0 0
    %2069 = vmatmul.mubr.bf16.gmra.mrb[0].mxu0 %v370
    %v2070 = vpop.f32.mrb[0].mxu0
    %v2071 = vadd.f32 0.0, %v2070
    %v2072 = vpop.f32.mrb[0].mxu0
    %v2073 = vadd.f32 0.0, %v2072
    %v2074 = vpop.f32.mrb[0].mxu0
    %v2075 = vadd.f32 0.0, %v2074
    %v2076 = vpop.f32.mrb[0].mxu0
    %v2077 = vadd.f32 0.0, %v2076
    %2078 = vdwg.mxu0
    %v2079 = vmul.f32 %v2071, 2.0
    %v2080 = vmul.f32 %v2073, 2.0
    %v2081 = vmul.f32 %v2075, 2.0
    %v2082 = vmul.f32 %v2077, 2.0
    %v2083 = vsub.f32 %v2079, %v1987
    %v2084 = vsub.f32 %v2080, %v1988
    %v2085 = vsub.f32 %v2081, %v1989
    %v2086 = vsub.f32 %v2082, %v1990
    %s2087 = scalar_lea.vmem %s1, 1536
    %v2088 = vld [vmem:[%s2087] sm:$0xff]
    %v2089 = vld [vmem:[%s2087 + $0x8] sm:$0xff]
    %v2090 = vld [vmem:[%s2087 + $0x10] sm:$0xff]
    %v2091 = vld [vmem:[%s2087 + $0x18] sm:$0xff]
    %v2092 = vld [vmem:[%s2087 + $0x20] sm:$0xff]
    %v2093 = vld [vmem:[%s2087 + $0x28] sm:$0xff]
    %v2094 = vld [vmem:[%s2087 + $0x30] sm:$0xff]
    %v2095 = vld [vmem:[%s2087 + $0x38] sm:$0xff]
    %v2096 = vld [vmem:[%s2087 + $0x40] sm:$0xff]
    %v2097 = vld [vmem:[%s2087 + $0x48] sm:$0xff]
    %v2098 = vld [vmem:[%s2087 + $0x50] sm:$0xff]
    %v2099 = vld [vmem:[%s2087 + $0x58] sm:$0xff]
    %v2100 = vld [vmem:[%s2087 + $0x60] sm:$0xff]
    %v2101 = vld [vmem:[%s2087 + $0x68] sm:$0xff]
    %v2102 = vld [vmem:[%s2087 + $0x70] sm:$0xff]
    %v2103 = vld [vmem:[%s2087 + $0x78] sm:$0xff]
    %v2104 = vld [vmem:[%s2087 + $0x80] sm:$0xff]
    %v2105 = vld [vmem:[%s2087 + $0x88] sm:$0xff]
    %v2106 = vld [vmem:[%s2087 + $0x90] sm:$0xff]
    %v2107 = vld [vmem:[%s2087 + $0x98] sm:$0xff]
    %v2108 = vld [vmem:[%s2087 + $0xa0] sm:$0xff]
    %v2109 = vld [vmem:[%s2087 + $0xa8] sm:$0xff]
    %v2110 = vld [vmem:[%s2087 + $0xb0] sm:$0xff]
    %v2111 = vld [vmem:[%s2087 + $0xb8] sm:$0xff]
    %v2112 = vld [vmem:[%s2087 + $0xc0] sm:$0xff]
    %v2113 = vld [vmem:[%s2087 + $0xc8] sm:$0xff]
    %v2114 = vld [vmem:[%s2087 + $0xd0] sm:$0xff]
    %v2115 = vld [vmem:[%s2087 + $0xd8] sm:$0xff]
    %v2116 = vld [vmem:[%s2087 + $0xe0] sm:$0xff]
    %v2117 = vld [vmem:[%s2087 + $0xe8] sm:$0xff]
    %v2118 = vld [vmem:[%s2087 + $0xf0] sm:$0xff]
    %v2119 = vld [vmem:[%s2087 + $0xf8] sm:$0xff]
    %v2120 = vpack.c.bf16 %v2032, %v2028
    %v2121 = vpack.c.bf16 %v2034, %v2030
    %s2122 = scalar_lea.vmem %s1, 1792
    %v2123 = vld [vmem:[%s2122] sm:$0xff]
    %v2124 = vld [vmem:[%s2122 + $0x8] sm:$0xff]
    %v2125 = vld [vmem:[%s2122 + $0x10] sm:$0xff]
    %v2126 = vld [vmem:[%s2122 + $0x18] sm:$0xff]
    %v2127 = vld [vmem:[%s2122 + $0x20] sm:$0xff]
    %v2128 = vld [vmem:[%s2122 + $0x28] sm:$0xff]
    %v2129 = vld [vmem:[%s2122 + $0x30] sm:$0xff]
    %v2130 = vld [vmem:[%s2122 + $0x38] sm:$0xff]
    %v2131 = vld [vmem:[%s2122 + $0x40] sm:$0xff]
    %v2132 = vld [vmem:[%s2122 + $0x48] sm:$0xff]
    %v2133 = vld [vmem:[%s2122 + $0x50] sm:$0xff]
    %v2134 = vld [vmem:[%s2122 + $0x58] sm:$0xff]
    %v2135 = vld [vmem:[%s2122 + $0x60] sm:$0xff]
    %v2136 = vld [vmem:[%s2122 + $0x68] sm:$0xff]
    %v2137 = vld [vmem:[%s2122 + $0x70] sm:$0xff]
    %v2138 = vld [vmem:[%s2122 + $0x78] sm:$0xff]
    %v2139 = vld [vmem:[%s2122 + $0x80] sm:$0xff]
    %v2140 = vld [vmem:[%s2122 + $0x88] sm:$0xff]
    %v2141 = vld [vmem:[%s2122 + $0x90] sm:$0xff]
    %v2142 = vld [vmem:[%s2122 + $0x98] sm:$0xff]
    %v2143 = vld [vmem:[%s2122 + $0xa0] sm:$0xff]
    %v2144 = vld [vmem:[%s2122 + $0xa8] sm:$0xff]
    %v2145 = vld [vmem:[%s2122 + $0xb0] sm:$0xff]
    %v2146 = vld [vmem:[%s2122 + $0xb8] sm:$0xff]
    %v2147 = vld [vmem:[%s2122 + $0xc0] sm:$0xff]
    %v2148 = vld [vmem:[%s2122 + $0xc8] sm:$0xff]
    %v2149 = vld [vmem:[%s2122 + $0xd0] sm:$0xff]
    %v2150 = vld [vmem:[%s2122 + $0xd8] sm:$0xff]
    %v2151 = vld [vmem:[%s2122 + $0xe0] sm:$0xff]
    %v2152 = vld [vmem:[%s2122 + $0xe8] sm:$0xff]
    %v2153 = vld [vmem:[%s2122 + $0xf0] sm:$0xff]
    %v2154 = vld [vmem:[%s2122 + $0xf8] sm:$0xff]
    %v2187 = vunpack.c.l.b16 %v2123
    %v2188 = vunpack.c.h.b16 %v2123
    %v2189 = vunpack.c.l.b16 %v2124
    %v2190 = vunpack.c.h.b16 %v2124
    %v2191 = vunpack.c.l.b16 %v2125
    %v2192 = vunpack.c.h.b16 %v2125
    %v2193 = vunpack.c.l.b16 %v2126
    %v2194 = vunpack.c.h.b16 %v2126
    %v2195 = vunpack.c.l.b16 %v2127
    %v2196 = vunpack.c.h.b16 %v2127
    %v2197 = vunpack.c.l.b16 %v2128
    %v2198 = vunpack.c.h.b16 %v2128
    %v2199 = vunpack.c.l.b16 %v2129
    %v2200 = vunpack.c.h.b16 %v2129
    %v2201 = vunpack.c.l.b16 %v2130
    %v2202 = vunpack.c.h.b16 %v2130
    %v2203 = vunpack.c.l.b16 %v2131
    %v2204 = vunpack.c.h.b16 %v2131
    %v2205 = vunpack.c.l.b16 %v2132
    %v2206 = vunpack.c.h.b16 %v2132
    %v2207 = vunpack.c.l.b16 %v2133
    %v2208 = vunpack.c.h.b16 %v2133
    %v2209 = vunpack.c.l.b16 %v2134
    %v2210 = vunpack.c.h.b16 %v2134
    %v2211 = vunpack.c.l.b16 %v2135
    %v2212 = vunpack.c.h.b16 %v2135
    %v2213 = vunpack.c.l.b16 %v2136
    %v2214 = vunpack.c.h.b16 %v2136
    %v2215 = vunpack.c.l.b16 %v2137
    %v2216 = vunpack.c.h.b16 %v2137
    %v2217 = vunpack.c.l.b16 %v2138
    %v2218 = vunpack.c.h.b16 %v2138
    %v2219 = vunpack.c.l.b16 %v2139
    %v2220 = vunpack.c.h.b16 %v2139
    %v2221 = vunpack.c.l.b16 %v2140
    %v2222 = vunpack.c.h.b16 %v2140
    %v2223 = vunpack.c.l.b16 %v2141
    %v2224 = vunpack.c.h.b16 %v2141
    %v2225 = vunpack.c.l.b16 %v2142
    %v2226 = vunpack.c.h.b16 %v2142
    %v2227 = vunpack.c.l.b16 %v2143
    %v2228 = vunpack.c.h.b16 %v2143
    %v2229 = vunpack.c.l.b16 %v2144
    %v2230 = vunpack.c.h.b16 %v2144
    %v2231 = vunpack.c.l.b16 %v2145
    %v2232 = vunpack.c.h.b16 %v2145
    %v2233 = vunpack.c.l.b16 %v2146
    %v2234 = vunpack.c.h.b16 %v2146
    %v2235 = vunpack.c.l.b16 %v2147
    %v2236 = vunpack.c.h.b16 %v2147
    %v2237 = vunpack.c.l.b16 %v2148
    %v2238 = vunpack.c.h.b16 %v2148
    %v2239 = vunpack.c.l.b16 %v2149
    %v2240 = vunpack.c.h.b16 %v2149
    %v2241 = vunpack.c.l.b16 %v2150
    %v2242 = vunpack.c.h.b16 %v2150
    %v2243 = vunpack.c.l.b16 %v2151
    %v2244 = vunpack.c.h.b16 %v2151
    %v2245 = vunpack.c.l.b16 %v2152
    %v2246 = vunpack.c.h.b16 %v2152
    %v2247 = vunpack.c.l.b16 %v2153
    %v2248 = vunpack.c.h.b16 %v2153
    %v2249 = vunpack.c.l.b16 %v2154
    %v2250 = vunpack.c.h.b16 %v2154
    %v2251 = vpack.c.b16 %v2189, %v2187
    %v2252 = vpack.c.b16 %v2190, %v2188
    %v2253 = vpack.c.b16 %v2193, %v2191
    %v2254 = vpack.c.b16 %v2194, %v2192
    %v2255 = vpack.c.b16 %v2197, %v2195
    %v2256 = vpack.c.b16 %v2198, %v2196
    %v2257 = vpack.c.b16 %v2201, %v2199
    %v2258 = vpack.c.b16 %v2202, %v2200
    %v2259 = vpack.c.b16 %v2205, %v2203
    %v2260 = vpack.c.b16 %v2206, %v2204
    %v2261 = vpack.c.b16 %v2209, %v2207
    %v2262 = vpack.c.b16 %v2210, %v2208
    %v2263 = vpack.c.b16 %v2213, %v2211
    %v2264 = vpack.c.b16 %v2214, %v2212
    %v2265 = vpack.c.b16 %v2217, %v2215
    %v2266 = vpack.c.b16 %v2218, %v2216
    %v2267 = vpack.c.b16 %v2221, %v2219
    %v2268 = vpack.c.b16 %v2222, %v2220
    %v2269 = vpack.c.b16 %v2225, %v2223
    %v2270 = vpack.c.b16 %v2226, %v2224
    %v2271 = vpack.c.b16 %v2229, %v2227
    %v2272 = vpack.c.b16 %v2230, %v2228
    %v2273 = vpack.c.b16 %v2233, %v2231
    %v2274 = vpack.c.b16 %v2234, %v2232
    %v2275 = vpack.c.b16 %v2237, %v2235
    %v2276 = vpack.c.b16 %v2238, %v2236
    %v2277 = vpack.c.b16 %v2241, %v2239
    %v2278 = vpack.c.b16 %v2242, %v2240
    %v2279 = vpack.c.b16 %v2245, %v2243
    %v2280 = vpack.c.b16 %v2246, %v2244
    %v2281 = vpack.c.b16 %v2249, %v2247
    %v2282 = vpack.c.b16 %v2250, %v2248
    %2315 = vmatprep.subr.bf16.mxu0 %v2252
    %2316 = vmatpush1.bf16.msra.mxu0 %v2251
    %2317 = vmatprep.subr.bf16.mxu0 %v2254
    %2318 = vmatpush1.bf16.msra.mxu0 %v2253
    %2319 = vmatprep.subr.bf16.mxu0 %v2256
    %2320 = vmatpush1.bf16.msra.mxu0 %v2255
    %2321 = vmatprep.subr.bf16.mxu0 %v2258
    %2322 = vmatpush1.bf16.msra.mxu0 %v2257
    %2323 = vmatprep.subr.bf16.mxu0 %v2260
    %2324 = vmatpush1.bf16.msra.mxu0 %v2259
    %2325 = vmatprep.subr.bf16.mxu0 %v2262
    %2326 = vmatpush1.bf16.msra.mxu0 %v2261
    %2327 = vmatprep.subr.bf16.mxu0 %v2264
    %2328 = vmatpush1.bf16.msra.mxu0 %v2263
    %2329 = vmatprep.subr.bf16.mxu0 %v2266
    %2330 = vmatpush1.bf16.msra.mxu0 %v2265
    %2331 = vmatprep.subr.bf16.mxu0 %v2268
    %2332 = vmatpush1.bf16.msra.mxu0 %v2267
    %2333 = vmatprep.subr.bf16.mxu0 %v2270
    %2334 = vmatpush1.bf16.msra.mxu0 %v2269
    %2335 = vmatprep.subr.bf16.mxu0 %v2272
    %2336 = vmatpush1.bf16.msra.mxu0 %v2271
    %2337 = vmatprep.subr.bf16.mxu0 %v2274
    %2338 = vmatpush1.bf16.msra.mxu0 %v2273
    %2339 = vmatprep.subr.bf16.mxu0 %v2276
    %2340 = vmatpush1.bf16.msra.mxu0 %v2275
    %2341 = vmatprep.subr.bf16.mxu0 %v2278
    %2342 = vmatpush1.bf16.msra.mxu0 %v2277
    %2343 = vmatprep.subr.bf16.mxu0 %v2280
    %2344 = vmatpush1.bf16.msra.mxu0 %v2279
    %2345 = vmatprep.subr.bf16.mxu0 %v2282
    %2346 = vmatpush1.bf16.msra.mxu0 %v2281
    %2347 = vmatprep.mubr.bf16.mxu0 %v2121
    %2348 = vmatmul.mubr.bf16.gmra.mrb[0].mxu0 %v2120
    %v2349 = vpop.f32.mrb[0].mxu0
    %v2350 = vadd.f32 0.0, %v2349
    %v2351 = vpop.f32.mrb[0].mxu0
    %v2352 = vadd.f32 0.0, %v2351
    %v2353 = vpop.f32.mrb[0].mxu0
    %v2354 = vadd.f32 0.0, %v2353
    %v2355 = vpop.f32.mrb[0].mxu0
    %v2356 = vadd.f32 0.0, %v2355
    %2357 = vdwg.mxu0
    %v2390 = vunpack.c.l.b16 %v2088
    %v2391 = vunpack.c.h.b16 %v2088
    %v2392 = vunpack.c.l.b16 %v2089
    %v2393 = vunpack.c.h.b16 %v2089
    %v2394 = vunpack.c.l.b16 %v2090
    %v2395 = vunpack.c.h.b16 %v2090
    %v2396 = vunpack.c.l.b16 %v2091
    %v2397 = vunpack.c.h.b16 %v2091
    %v2398 = vunpack.c.l.b16 %v2092
    %v2399 = vunpack.c.h.b16 %v2092
    %v2400 = vunpack.c.l.b16 %v2093
    %v2401 = vunpack.c.h.b16 %v2093
    %v2402 = vunpack.c.l.b16 %v2094
    %v2403 = vunpack.c.h.b16 %v2094
    %v2404 = vunpack.c.l.b16 %v2095
    %v2405 = vunpack.c.h.b16 %v2095
    %v2406 = vunpack.c.l.b16 %v2096
    %v2407 = vunpack.c.h.b16 %v2096
    %v2408 = vunpack.c.l.b16 %v2097
    %v2409 = vunpack.c.h.b16 %v2097
    %v2410 = vunpack.c.l.b16 %v2098
    %v2411 = vunpack.c.h.b16 %v2098
    %v2412 = vunpack.c.l.b16 %v2099
    %v2413 = vunpack.c.h.b16 %v2099
    %v2414 = vunpack.c.l.b16 %v2100
    %v2415 = vunpack.c.h.b16 %v2100
    %v2416 = vunpack.c.l.b16 %v2101
    %v2417 = vunpack.c.h.b16 %v2101
    %v2418 = vunpack.c.l.b16 %v2102
    %v2419 = vunpack.c.h.b16 %v2102
    %v2420 = vunpack.c.l.b16 %v2103
    %v2421 = vunpack.c.h.b16 %v2103
    %v2422 = vunpack.c.l.b16 %v2104
    %v2423 = vunpack.c.h.b16 %v2104
    %v2424 = vunpack.c.l.b16 %v2105
    %v2425 = vunpack.c.h.b16 %v2105
    %v2426 = vunpack.c.l.b16 %v2106
    %v2427 = vunpack.c.h.b16 %v2106
    %v2428 = vunpack.c.l.b16 %v2107
    %v2429 = vunpack.c.h.b16 %v2107
    %v2430 = vunpack.c.l.b16 %v2108
    %v2431 = vunpack.c.h.b16 %v2108
    %v2432 = vunpack.c.l.b16 %v2109
    %v2433 = vunpack.c.h.b16 %v2109
    %v2434 = vunpack.c.l.b16 %v2110
    %v2435 = vunpack.c.h.b16 %v2110
    %v2436 = vunpack.c.l.b16 %v2111
    %v2437 = vunpack.c.h.b16 %v2111
    %v2438 = vunpack.c.l.b16 %v2112
    %v2439 = vunpack.c.h.b16 %v2112
    %v2440 = vunpack.c.l.b16 %v2113
    %v2441 = vunpack.c.h.b16 %v2113
    %v2442 = vunpack.c.l.b16 %v2114
    %v2443 = vunpack.c.h.b16 %v2114
    %v2444 = vunpack.c.l.b16 %v2115
    %v2445 = vunpack.c.h.b16 %v2115
    %v2446 = vunpack.c.l.b16 %v2116
    %v2447 = vunpack.c.h.b16 %v2116
    %v2448 = vunpack.c.l.b16 %v2117
    %v2449 = vunpack.c.h.b16 %v2117
    %v2450 = vunpack.c.l.b16 %v2118
    %v2451 = vunpack.c.h.b16 %v2118
    %v2452 = vunpack.c.l.b16 %v2119
    %v2453 = vunpack.c.h.b16 %v2119
    %v2454 = vpack.c.b16 %v2392, %v2390
    %v2455 = vpack.c.b16 %v2393, %v2391
    %v2456 = vpack.c.b16 %v2396, %v2394
    %v2457 = vpack.c.b16 %v2397, %v2395
    %v2458 = vpack.c.b16 %v2400, %v2398
    %v2459 = vpack.c.b16 %v2401, %v2399
    %v2460 = vpack.c.b16 %v2404, %v2402
    %v2461 = vpack.c.b16 %v2405, %v2403
    %v2462 = vpack.c.b16 %v2408, %v2406
    %v2463 = vpack.c.b16 %v2409, %v2407
    %v2464 = vpack.c.b16 %v2412, %v2410
    %v2465 = vpack.c.b16 %v2413, %v2411
    %v2466 = vpack.c.b16 %v2416, %v2414
    %v2467 = vpack.c.b16 %v2417, %v2415
    %v2468 = vpack.c.b16 %v2420, %v2418
    %v2469 = vpack.c.b16 %v2421, %v2419
    %v2470 = vpack.c.b16 %v2424, %v2422
    %v2471 = vpack.c.b16 %v2425, %v2423
    %v2472 = vpack.c.b16 %v2428, %v2426
    %v2473 = vpack.c.b16 %v2429, %v2427
    %v2474 = vpack.c.b16 %v2432, %v2430
    %v2475 = vpack.c.b16 %v2433, %v2431
    %v2476 = vpack.c.b16 %v2436, %v2434
    %v2477 = vpack.c.b16 %v2437, %v2435
    %v2478 = vpack.c.b16 %v2440, %v2438
    %v2479 = vpack.c.b16 %v2441, %v2439
    %v2480 = vpack.c.b16 %v2444, %v2442
    %v2481 = vpack.c.b16 %v2445, %v2443
    %v2482 = vpack.c.b16 %v2448, %v2446
    %v2483 = vpack.c.b16 %v2449, %v2447
    %v2484 = vpack.c.b16 %v2452, %v2450
    %v2485 = vpack.c.b16 %v2453, %v2451
    %2518 = vmatprep.subr.bf16.mxu0 %v2455
    %2519 = vmatpush1.bf16.msra.mxu0 %v2454
    %2520 = vmatprep.subr.bf16.mxu0 %v2457
    %2521 = vmatpush1.bf16.msra.mxu0 %v2456
    %2522 = vmatprep.subr.bf16.mxu0 %v2459
    %2523 = vmatpush1.bf16.msra.mxu0 %v2458
    %2524 = vmatprep.subr.bf16.mxu0 %v2461
    %2525 = vmatpush1.bf16.msra.mxu0 %v2460
    %2526 = vmatprep.subr.bf16.mxu0 %v2463
    %2527 = vmatpush1.bf16.msra.mxu0 %v2462
    %2528 = vmatprep.subr.bf16.mxu0 %v2465
    %2529 = vmatpush1.bf16.msra.mxu0 %v2464
    %2530 = vmatprep.subr.bf16.mxu0 %v2467
    %2531 = vmatpush1.bf16.msra.mxu0 %v2466
    %2532 = vmatprep.subr.bf16.mxu0 %v2469
    %2533 = vmatpush1.bf16.msra.mxu0 %v2468
    %2534 = vmatprep.subr.bf16.mxu0 %v2471
    %2535 = vmatpush1.bf16.msra.mxu0 %v2470
    %2536 = vmatprep.subr.bf16.mxu0 %v2473
    %2537 = vmatpush1.bf16.msra.mxu0 %v2472
    %2538 = vmatprep.subr.bf16.mxu0 %v2475
    %2539 = vmatpush1.bf16.msra.mxu0 %v2474
    %2540 = vmatprep.subr.bf16.mxu0 %v2477
    %2541 = vmatpush1.bf16.msra.mxu0 %v2476
    %2542 = vmatprep.subr.bf16.mxu0 %v2479
    %2543 = vmatpush1.bf16.msra.mxu0 %v2478
    %2544 = vmatprep.subr.bf16.mxu0 %v2481
    %2545 = vmatpush1.bf16.msra.mxu0 %v2480
    %2546 = vmatprep.subr.bf16.mxu0 %v2483
    %2547 = vmatpush1.bf16.msra.mxu0 %v2482
    %2548 = vmatprep.subr.bf16.mxu0 %v2485
    %2549 = vmatpush1.bf16.msra.mxu0 %v2484
    %2550 = vmatprep.mubr.bf16.mxu0 %v1992
    %2551 = vmatmul.mubr.bf16.gmra.mrb[0].mxu0 %v1991
    %v2552 = vpop.f32.mrb[0].mxu0
    %v2553 = vadd.f32 %v2350, %v2552
    %v2554 = vpop.f32.mrb[0].mxu0
    %v2555 = vadd.f32 %v2352, %v2554
    %v2556 = vpop.f32.mrb[0].mxu0
    %v2557 = vadd.f32 %v2354, %v2556
    %v2558 = vpop.f32.mrb[0].mxu0
    %v2559 = vadd.f32 %v2356, %v2558
    %2560 = vdwg.mxu0
    %v2561 = vpack.c.bf16 %v2085, %v2083
    %v2562 = vpack.c.bf16 %v2086, %v2084
    %s2563 = scalar_lea.vmem %s1, 2048
    %v2564 = vld [vmem:[%s2563] sm:$0xff]
    %v2565 = vld [vmem:[%s2563 + $0x8] sm:$0xff]
    %v2566 = vld [vmem:[%s2563 + $0x10] sm:$0xff]
    %v2567 = vld [vmem:[%s2563 + $0x18] sm:$0xff]
    %v2568 = vld [vmem:[%s2563 + $0x20] sm:$0xff]
    %v2569 = vld [vmem:[%s2563 + $0x28] sm:$0xff]
    %v2570 = vld [vmem:[%s2563 + $0x30] sm:$0xff]
    %v2571 = vld [vmem:[%s2563 + $0x38] sm:$0xff]
    %v2572 = vld [vmem:[%s2563 + $0x40] sm:$0xff]
    %v2573 = vld [vmem:[%s2563 + $0x48] sm:$0xff]
    %v2574 = vld [vmem:[%s2563 + $0x50] sm:$0xff]
    %v2575 = vld [vmem:[%s2563 + $0x58] sm:$0xff]
    %v2576 = vld [vmem:[%s2563 + $0x60] sm:$0xff]
    %v2577 = vld [vmem:[%s2563 + $0x68] sm:$0xff]
    %v2578 = vld [vmem:[%s2563 + $0x70] sm:$0xff]
    %v2579 = vld [vmem:[%s2563 + $0x78] sm:$0xff]
    %v2580 = vld [vmem:[%s2563 + $0x80] sm:$0xff]
    %v2581 = vld [vmem:[%s2563 + $0x88] sm:$0xff]
    %v2582 = vld [vmem:[%s2563 + $0x90] sm:$0xff]
    %v2583 = vld [vmem:[%s2563 + $0x98] sm:$0xff]
    %v2584 = vld [vmem:[%s2563 + $0xa0] sm:$0xff]
    %v2585 = vld [vmem:[%s2563 + $0xa8] sm:$0xff]
    %v2586 = vld [vmem:[%s2563 + $0xb0] sm:$0xff]
    %v2587 = vld [vmem:[%s2563 + $0xb8] sm:$0xff]
    %v2588 = vld [vmem:[%s2563 + $0xc0] sm:$0xff]
    %v2589 = vld [vmem:[%s2563 + $0xc8] sm:$0xff]
    %v2590 = vld [vmem:[%s2563 + $0xd0] sm:$0xff]
    %v2591 = vld [vmem:[%s2563 + $0xd8] sm:$0xff]
    %v2592 = vld [vmem:[%s2563 + $0xe0] sm:$0xff]
    %v2593 = vld [vmem:[%s2563 + $0xe8] sm:$0xff]
    %v2594 = vld [vmem:[%s2563 + $0xf0] sm:$0xff]
    %v2595 = vld [vmem:[%s2563 + $0xf8] sm:$0xff]
    %v2628 = vunpack.c.l.b16 %v2564
    %v2629 = vunpack.c.h.b16 %v2564
    %v2630 = vunpack.c.l.b16 %v2565
    %v2631 = vunpack.c.h.b16 %v2565
    %v2632 = vunpack.c.l.b16 %v2566
    %v2633 = vunpack.c.h.b16 %v2566
    %v2634 = vunpack.c.l.b16 %v2567
    %v2635 = vunpack.c.h.b16 %v2567
    %v2636 = vunpack.c.l.b16 %v2568
    %v2637 = vunpack.c.h.b16 %v2568
    %v2638 = vunpack.c.l.b16 %v2569
    %v2639 = vunpack.c.h.b16 %v2569
    %v2640 = vunpack.c.l.b16 %v2570
    %v2641 = vunpack.c.h.b16 %v2570
    %v2642 = vunpack.c.l.b16 %v2571
    %v2643 = vunpack.c.h.b16 %v2571
    %v2644 = vunpack.c.l.b16 %v2572
    %v2645 = vunpack.c.h.b16 %v2572
    %v2646 = vunpack.c.l.b16 %v2573
    %v2647 = vunpack.c.h.b16 %v2573
    %v2648 = vunpack.c.l.b16 %v2574
    %v2649 = vunpack.c.h.b16 %v2574
    %v2650 = vunpack.c.l.b16 %v2575
    %v2651 = vunpack.c.h.b16 %v2575
    %v2652 = vunpack.c.l.b16 %v2576
    %v2653 = vunpack.c.h.b16 %v2576
    %v2654 = vunpack.c.l.b16 %v2577
    %v2655 = vunpack.c.h.b16 %v2577
    %v2656 = vunpack.c.l.b16 %v2578
    %v2657 = vunpack.c.h.b16 %v2578
    %v2658 = vunpack.c.l.b16 %v2579
    %v2659 = vunpack.c.h.b16 %v2579
    %v2660 = vunpack.c.l.b16 %v2580
    %v2661 = vunpack.c.h.b16 %v2580
    %v2662 = vunpack.c.l.b16 %v2581
    %v2663 = vunpack.c.h.b16 %v2581
    %v2664 = vunpack.c.l.b16 %v2582
    %v2665 = vunpack.c.h.b16 %v2582
    %v2666 = vunpack.c.l.b16 %v2583
    %v2667 = vunpack.c.h.b16 %v2583
    %v2668 = vunpack.c.l.b16 %v2584
    %v2669 = vunpack.c.h.b16 %v2584
    %v2670 = vunpack.c.l.b16 %v2585
    %v2671 = vunpack.c.h.b16 %v2585
    %v2672 = vunpack.c.l.b16 %v2586
    %v2673 = vunpack.c.h.b16 %v2586
    %v2674 = vunpack.c.l.b16 %v2587
    %v2675 = vunpack.c.h.b16 %v2587
    %v2676 = vunpack.c.l.b16 %v2588
    %v2677 = vunpack.c.h.b16 %v2588
    %v2678 = vunpack.c.l.b16 %v2589
    %v2679 = vunpack.c.h.b16 %v2589
    %v2680 = vunpack.c.l.b16 %v2590
    %v2681 = vunpack.c.h.b16 %v2590
    %v2682 = vunpack.c.l.b16 %v2591
    %v2683 = vunpack.c.h.b16 %v2591
    %v2684 = vunpack.c.l.b16 %v2592
    %v2685 = vunpack.c.h.b16 %v2592
    %v2686 = vunpack.c.l.b16 %v2593
    %v2687 = vunpack.c.h.b16 %v2593
    %v2688 = vunpack.c.l.b16 %v2594
    %v2689 = vunpack.c.h.b16 %v2594
    %v2690 = vunpack.c.l.b16 %v2595
    %v2691 = vunpack.c.h.b16 %v2595
    %v2692 = vpack.c.b16 %v2630, %v2628
    %v2693 = vpack.c.b16 %v2631, %v2629
    %v2694 = vpack.c.b16 %v2634, %v2632
    %v2695 = vpack.c.b16 %v2635, %v2633
    %v2696 = vpack.c.b16 %v2638, %v2636
    %v2697 = vpack.c.b16 %v2639, %v2637
    %v2698 = vpack.c.b16 %v2642, %v2640
    %v2699 = vpack.c.b16 %v2643, %v2641
    %v2700 = vpack.c.b16 %v2646, %v2644
    %v2701 = vpack.c.b16 %v2647, %v2645
    %v2702 = vpack.c.b16 %v2650, %v2648
    %v2703 = vpack.c.b16 %v2651, %v2649
    %v2704 = vpack.c.b16 %v2654, %v2652
    %v2705 = vpack.c.b16 %v2655, %v2653
    %v2706 = vpack.c.b16 %v2658, %v2656
    %v2707 = vpack.c.b16 %v2659, %v2657
    %v2708 = vpack.c.b16 %v2662, %v2660
    %v2709 = vpack.c.b16 %v2663, %v2661
    %v2710 = vpack.c.b16 %v2666, %v2664
    %v2711 = vpack.c.b16 %v2667, %v2665
    %v2712 = vpack.c.b16 %v2670, %v2668
    %v2713 = vpack.c.b16 %v2671, %v2669
    %v2714 = vpack.c.b16 %v2674, %v2672
    %v2715 = vpack.c.b16 %v2675, %v2673
    %v2716 = vpack.c.b16 %v2678, %v2676
    %v2717 = vpack.c.b16 %v2679, %v2677
    %v2718 = vpack.c.b16 %v2682, %v2680
    %v2719 = vpack.c.b16 %v2683, %v2681
    %v2720 = vpack.c.b16 %v2686, %v2684
    %v2721 = vpack.c.b16 %v2687, %v2685
    %v2722 = vpack.c.b16 %v2690, %v2688
    %v2723 = vpack.c.b16 %v2691, %v2689
    %2756 = vmatprep.subr.bf16.mxu0 %v2693
    %2757 = vmatpush1.bf16.msra.mxu0 %v2692
    %2758 = vmatprep.subr.bf16.mxu0 %v2695
    %2759 = vmatpush1.bf16.msra.mxu0 %v2694
    %2760 = vmatprep.subr.bf16.mxu0 %v2697
    %2761 = vmatpush1.bf16.msra.mxu0 %v2696
    %2762 = vmatprep.subr.bf16.mxu0 %v2699
    %2763 = vmatpush1.bf16.msra.mxu0 %v2698
    %2764 = vmatprep.subr.bf16.mxu0 %v2701
    %2765 = vmatpush1.bf16.msra.mxu0 %v2700
    %2766 = vmatprep.subr.bf16.mxu0 %v2703
    %2767 = vmatpush1.bf16.msra.mxu0 %v2702
    %2768 = vmatprep.subr.bf16.mxu0 %v2705
    %2769 = vmatpush1.bf16.msra.mxu0 %v2704
    %2770 = vmatprep.subr.bf16.mxu0 %v2707
    %2771 = vmatpush1.bf16.msra.mxu0 %v2706
    %2772 = vmatprep.subr.bf16.mxu0 %v2709
    %2773 = vmatpush1.bf16.msra.mxu0 %v2708
    %2774 = vmatprep.subr.bf16.mxu0 %v2711
    %2775 = vmatpush1.bf16.msra.mxu0 %v2710
    %2776 = vmatprep.subr.bf16.mxu0 %v2713
    %2777 = vmatpush1.bf16.msra.mxu0 %v2712
    %2778 = vmatprep.subr.bf16.mxu0 %v2715
    %2779 = vmatpush1.bf16.msra.mxu0 %v2714
    %2780 = vmatprep.subr.bf16.mxu0 %v2717
    %2781 = vmatpush1.bf16.msra.mxu0 %v2716
    %2782 = vmatprep.subr.bf16.mxu0 %v2719
    %2783 = vmatpush1.bf16.msra.mxu0 %v2718
    %2784 = vmatprep.subr.bf16.mxu0 %v2721
    %2785 = vmatpush1.bf16.msra.mxu0 %v2720
    %2786 = vmatprep.subr.bf16.mxu0 %v2723
    %2787 = vmatpush1.bf16.msra.mxu0 %v2722
    %2788 = vmatprep.mubr.bf16.mxu0 %v2562
    %2789 = vmatmul.mubr.bf16.gmra.mrb[0].mxu0 %v2561
    %v2790 = vpop.f32.mrb[0].mxu0
    %v2791 = vadd.f32 0.0, %v2790
    %v2792 = vpop.f32.mrb[0].mxu0
    %v2793 = vadd.f32 0.0, %v2792
    %v2794 = vpop.f32.mrb[0].mxu0
    %v2795 = vadd.f32 0.0, %v2794
    %v2796 = vpop.f32.mrb[0].mxu0
    %v2797 = vadd.f32 0.0, %v2796
    %2798 = vdwg.mxu0
    %v2799 = vadd.f32 %v2553, %v2791
    %v2800 = vadd.f32 %v2555, %v2793
    %v2801 = vadd.f32 %v2557, %v2795
    %v2802 = vadd.f32 %v2559, %v2797
    %s2803 = scalar_lea.vmem %s2, 4
    %v2804 = vld [vmem:[%s2803] sm:$0x3]
    %v2806 = vlaneseq
    %v2807 = vshrl.u32 %v2806, 7
    %v2808 = vsub.s32 0, %v2807
    %v2809 = vrot.slane %v2804, %v2808
    %v2810 = vlaneseq
    %v2811 = vshrl.u32 %v2810, 7
    %v2812 = vsub.s32 1, %v2811
    %v2813 = vrot.slane %v2804, %v2812
    %v2816 = vadd.f32 %v2799, %v2809
    %v2817 = vadd.f32 %v2800, %v2813
    %v2818 = vadd.f32 %v2801, %v2809
    %v2819 = vadd.f32 %v2802, %v2813
    %v2820 = vmax.f32 %v2816, 0.0
    %v2821 = vmax.f32 %v2817, 0.0
    %v2822 = vmax.f32 %v2818, 0.0
    %v2823 = vmax.f32 %v2819, 0.0
    %v2824 = vpack.c.bf16 %v2822, %v2820
    %v2825 = vpack.c.bf16 %v2823, %v2821
    %v2826 = vld [vmem:[%s3] sm:$0xf]
    %v2827 = vld [vmem:[%s3 + $0x4] sm:$0xf]
    %v2828 = vld [vmem:[%s3 + $0x8] sm:$0xf]
    %v2829 = vld [vmem:[%s3 + $0xc] sm:$0xf]
    %v2830 = vld [vmem:[%s3 + $0x10] sm:$0xf]
    %v2831 = vld [vmem:[%s3 + $0x14] sm:$0xf]
    %v2832 = vld [vmem:[%s3 + $0x18] sm:$0xf]
    %v2833 = vld [vmem:[%s3 + $0x1c] sm:$0xf]
    %v2834 = vld [vmem:[%s3 + $0x20] sm:$0xf]
    %v2835 = vld [vmem:[%s3 + $0x24] sm:$0xf]
    %v2836 = vld [vmem:[%s3 + $0x28] sm:$0xf]
    %v2837 = vld [vmem:[%s3 + $0x2c] sm:$0xf]
    %v2838 = vld [vmem:[%s3 + $0x30] sm:$0xf]
    %v2839 = vld [vmem:[%s3 + $0x34] sm:$0xf]
    %v2840 = vld [vmem:[%s3 + $0x38] sm:$0xf]
    %v2841 = vld [vmem:[%s3 + $0x3c] sm:$0xf]
    %v2842 = vld [vmem:[%s3 + $0x40] sm:$0xf]
    %v2843 = vld [vmem:[%s3 + $0x44] sm:$0xf]
    %v2844 = vld [vmem:[%s3 + $0x48] sm:$0xf]
    %v2845 = vld [vmem:[%s3 + $0x4c] sm:$0xf]
    %v2846 = vld [vmem:[%s3 + $0x50] sm:$0xf]
    %v2847 = vld [vmem:[%s3 + $0x54] sm:$0xf]
    %v2848 = vld [vmem:[%s3 + $0x58] sm:$0xf]
    %v2849 = vld [vmem:[%s3 + $0x5c] sm:$0xf]
    %v2850 = vld [vmem:[%s3 + $0x60] sm:$0xf]
    %v2851 = vld [vmem:[%s3 + $0x64] sm:$0xf]
    %v2852 = vld [vmem:[%s3 + $0x68] sm:$0xf]
    %v2853 = vld [vmem:[%s3 + $0x6c] sm:$0xf]
    %v2854 = vld [vmem:[%s3 + $0x70] sm:$0xf]
    %v2855 = vld [vmem:[%s3 + $0x74] sm:$0xf]
    %v2856 = vld [vmem:[%s3 + $0x78] sm:$0xf]
    %v2857 = vld [vmem:[%s3 + $0x7c] sm:$0xf]
    %v2858 = vld [vmem:[%s4] sm:$0x1]
    %v2860 = vlaneseq
    %v2861 = vshrl.u32 %v2860, 7
    %v2862 = vsub.s32 0, %v2861
    %v2863 = vrot.slane %v2858, %v2862
    %v2897 = vunpack.c.l.b16 %v2826
    %v2898 = vunpack.c.l.b16 %v2827
    %v2899 = vunpack.c.l.b16 %v2828
    %v2900 = vunpack.c.l.b16 %v2829
    %v2901 = vunpack.c.l.b16 %v2830
    %v2902 = vunpack.c.l.b16 %v2831
    %v2903 = vunpack.c.l.b16 %v2832
    %v2904 = vunpack.c.l.b16 %v2833
    %v2905 = vunpack.c.l.b16 %v2834
    %v2906 = vunpack.c.l.b16 %v2835
    %v2907 = vunpack.c.l.b16 %v2836
    %v2908 = vunpack.c.l.b16 %v2837
    %v2909 = vunpack.c.l.b16 %v2838
    %v2910 = vunpack.c.l.b16 %v2839
    %v2911 = vunpack.c.l.b16 %v2840
    %v2912 = vunpack.c.l.b16 %v2841
    %v2913 = vunpack.c.l.b16 %v2842
    %v2914 = vunpack.c.l.b16 %v2843
    %v2915 = vunpack.c.l.b16 %v2844
    %v2916 = vunpack.c.l.b16 %v2845
    %v2917 = vunpack.c.l.b16 %v2846
    %v2918 = vunpack.c.l.b16 %v2847
    %v2919 = vunpack.c.l.b16 %v2848
    %v2920 = vunpack.c.l.b16 %v2849
    %v2921 = vunpack.c.l.b16 %v2850
    %v2922 = vunpack.c.l.b16 %v2851
    %v2923 = vunpack.c.l.b16 %v2852
    %v2924 = vunpack.c.l.b16 %v2853
    %v2925 = vunpack.c.l.b16 %v2854
    %v2926 = vunpack.c.l.b16 %v2855
    %v2927 = vunpack.c.l.b16 %v2856
    %v2928 = vunpack.c.l.b16 %v2857
    %v2929 = vpack.c.b16 %v2898, %v2897
    %v2930 = vpack.c.b16 %v2900, %v2899
    %v2931 = vpack.c.b16 %v2902, %v2901
    %v2932 = vpack.c.b16 %v2904, %v2903
    %v2933 = vpack.c.b16 %v2906, %v2905
    %v2934 = vpack.c.b16 %v2908, %v2907
    %v2935 = vpack.c.b16 %v2910, %v2909
    %v2936 = vpack.c.b16 %v2912, %v2911
    %v2937 = vpack.c.b16 %v2914, %v2913
    %v2938 = vpack.c.b16 %v2916, %v2915
    %v2939 = vpack.c.b16 %v2918, %v2917
    %v2940 = vpack.c.b16 %v2920, %v2919
    %v2941 = vpack.c.b16 %v2922, %v2921
    %v2942 = vpack.c.b16 %v2924, %v2923
    %v2943 = vpack.c.b16 %v2926, %v2925
    %v2944 = vpack.c.b16 %v2928, %v2927
    %2961 = vmatprep.subr.bf16.mxu0 0
    %2962 = vmatpush1.bf16.msra.mxu0 %v2929
    %2963 = vmatprep.subr.bf16.mxu0 0
    %2964 = vmatpush1.bf16.msra.mxu0 %v2930
    %2965 = vmatprep.subr.bf16.mxu0 0
    %2966 = vmatpush1.bf16.msra.mxu0 %v2931
    %2967 = vmatprep.subr.bf16.mxu0 0
    %2968 = vmatpush1.bf16.msra.mxu0 %v2932
    %2969 = vmatprep.subr.bf16.mxu0 0
    %2970 = vmatpush1.bf16.msra.mxu0 %v2933
    %2971 = vmatprep.subr.bf16.mxu0 0
    %2972 = vmatpush1.bf16.msra.mxu0 %v2934
    %2973 = vmatprep.subr.bf16.mxu0 0
    %2974 = vmatpush1.bf16.msra.mxu0 %v2935
    %2975 = vmatprep.subr.bf16.mxu0 0
    %2976 = vmatpush1.bf16.msra.mxu0 %v2936
    %2977 = vmatprep.subr.bf16.mxu0 0
    %2978 = vmatpush1.bf16.msra.mxu0 %v2937
    %2979 = vmatprep.subr.bf16.mxu0 0
    %2980 = vmatpush1.bf16.msra.mxu0 %v2938
    %2981 = vmatprep.subr.bf16.mxu0 0
    %2982 = vmatpush1.bf16.msra.mxu0 %v2939
    %2983 = vmatprep.subr.bf16.mxu0 0
    %2984 = vmatpush1.bf16.msra.mxu0 %v2940
    %2985 = vmatprep.subr.bf16.mxu0 0
    %2986 = vmatpush1.bf16.msra.mxu0 %v2941
    %2987 = vmatprep.subr.bf16.mxu0 0
    %2988 = vmatpush1.bf16.msra.mxu0 %v2942
    %2989 = vmatprep.subr.bf16.mxu0 0
    %2990 = vmatpush1.bf16.msra.mxu0 %v2943
    %2991 = vmatprep.subr.bf16.mxu0 0
    %2992 = vmatpush1.bf16.msra.mxu0 %v2944
    %2993 = vmatprep.mubr.bf16.mxu0 %v2825
    %2994 = vmatmul.mubr.bf16.gmra.mrb[0].mxu0 %v2824
    %v2995 = vpop.f32.mrb[0].mxu0
    %v2996 = vadd.f32 %v2863, %v2995
    %v2997 = vpop.f32.mrb[0].mxu0
    %v2998 = vpop.f32.mrb[0].mxu0
    %v2999 = vadd.f32 %v2863, %v2998
    %v3000 = vpop.f32.mrb[0].mxu0
    %3001 = vdwg.mxu0
    %v3002 = vtanh.pop %v2996
    %v3003 = vtanh.pop %v2999
    %v3004 = vld [vmem:[%s5] sm:$0x1]
    %v3006 = vlaneseq
    %v3007 = vshrl.u32 %v3006, 7
    %v3008 = vsub.s32 0, %v3007
    %v3009 = vrot.slane %v3004, %v3008
    %v3011 = vmul.f32 %v3002, %v3009
    %v3012 = vmul.f32 %v3003, %v3009
    %3013 = vadd.xlane.f32.xlu0 %v3011
    %v3014 = vpop.xlane.xlu0 %3013
    %3015 = vadd.xlane.f32.xlu0 %v3012
    %v3016 = vpop.xlane.xlu0 %3015
    %3017 = vxpose.xlu0.b32.start [1/16] %v3014, 128
    %3018 = vxpose.xlu0.b32.cont [2/16] %v3016, 128
    %3019 = vxpose.xlu0.b32.cont [3/16] 0.0, 128
    %3020 = vxpose.xlu0.b32.cont [4/16] 0.0, 128
    %3021 = vxpose.xlu0.b32.cont [5/16] 0.0, 128
    %3022 = vxpose.xlu0.b32.cont [6/16] 0.0, 128
    %3023 = vxpose.xlu0.b32.cont [7/16] 0.0, 128
    %3024 = vxpose.xlu0.b32.cont [8/16] 0.0, 128
    %3025 = vxpose.xlu0.b32.cont [9/16] 0.0, 128
    %3026 = vxpose.xlu0.b32.cont [10/16] 0.0, 128
    %3027 = vxpose.xlu0.b32.cont [11/16] 0.0, 128
    %3028 = vxpose.xlu0.b32.cont [12/16] 0.0, 128
    %3029 = vxpose.xlu0.b32.cont [13/16] 0.0, 128
    %3030 = vxpose.xlu0.b32.cont [14/16] 0.0, 128
    %3031 = vxpose.xlu0.b32.cont [15/16] 0.0, 128
    %3032 = vxpose.xlu0.b32.end [16/16] 0.0, 128
    %v3033 = vpop.trf.xlu0
    %v3034 = vpop.trf.xlu0
    %v3035 = vpop.trf.xlu0
    %v3036 = vpop.trf.xlu0
    %v3037 = vpop.trf.xlu0
    %v3038 = vpop.trf.xlu0
    %v3039 = vpop.trf.xlu0
    %v3040 = vpop.trf.xlu0
    %v3041 = vpop.trf.xlu0
    %v3042 = vpop.trf.xlu0
    %v3043 = vpop.trf.xlu0
    %v3044 = vpop.trf.xlu0
    %v3045 = vpop.trf.xlu0
    %v3046 = vpop.trf.xlu0
    %v3047 = vpop.trf.xlu0
    %v3048 = vpop.trf.xlu0
    %vm3049 = vcmp.eq.s32.totalorder %v180, %v219
    %v3050 = vlaneseq
    %v3051 = vshrl.u32 %v3050, 7
    %v3052 = vsub.s32 0, %v3051
    %v3053 = vrot.slane %v3033, %v3052
    %v3054 = vsel %vm3049, %v3053, -inf
    %vm3055 = vcmask 123904
    %v3056 = vsel %vm3055, %v3054, -inf
    %3057 = vmax.xlane.f32.xlu0 %v3056
    %v3058 = vpop.xlane.xlu0 %3057
    %v3059 = vsub.f32 %v3053, %v3058
    %v3060 = vmul.f32 %v3059, 1.442695
    %v3061 = vpow.pop %v3060
    %v3062 = vsel %vm3049, %v3061, 0.0
    %v3063 = vsel %vm3055, %v3062, 0.0
    %3064 = vadd.xlane.f32.xlu0 %v3063
    %v3065 = vpop.xlane.xlu0 %3064
    %v3066 = vadd.f32 %v3065, 1e-16
    %v3067 = vrcp.pop %v3066
    %v3068 = vmul.f32 %v3062, %v3067
    %v3069 = vpack.c.bf16 %v3068, %v3068
    %v3071 = vsel %vm158, %v3069, 0
    %3073 = vmatprep.subr.bf16.mxu0 %v2825
    %3074 = vmatpush1.bf16.msra.mxu0 %v2824
    %3075 = vmatprep.subr.bf16.mxu0 0
    %3076 = vmatpush1.bf16.msra.mxu0 0
    %3077 = vmatprep.subr.bf16.mxu0 0
    %3078 = vmatpush1.bf16.msra.mxu0 0
    %3079 = vmatprep.subr.bf16.mxu0 0
    %3080 = vmatpush1.bf16.msra.mxu0 0
    %3081 = vmatprep.subr.bf16.mxu0 0
    %3082 = vmatpush1.bf16.msra.mxu0 0
    %3083 = vmatprep.subr.bf16.mxu0 0
    %3084 = vmatpush1.bf16.msra.mxu0 0
    %3085 = vmatprep.subr.bf16.mxu0 0
    %3086 = vmatpush1.bf16.msra.mxu0 0
    %3087 = vmatprep.subr.bf16.mxu0 0
    %3088 = vmatpush1.bf16.msra.mxu0 0
    %3089 = vmatprep.subr.bf16.mxu0 0
    %3090 = vmatpush1.bf16.msra.mxu0 0
    %3091 = vmatprep.subr.bf16.mxu0 0
    %3092 = vmatpush1.bf16.msra.mxu0 0
    %3093 = vmatprep.subr.bf16.mxu0 0
    %3094 = vmatpush1.bf16.msra.mxu0 0
    %3095 = vmatprep.subr.bf16.mxu0 0
    %3096 = vmatpush1.bf16.msra.mxu0 0
    %3097 = vmatprep.subr.bf16.mxu0 0
    %3098 = vmatpush1.bf16.msra.mxu0 0
    %3099 = vmatprep.subr.bf16.mxu0 0
    %3100 = vmatpush1.bf16.msra.mxu0 0
    %3101 = vmatprep.subr.bf16.mxu0 0
    %3102 = vmatpush1.bf16.msra.mxu0 0
    %3103 = vmatprep.subr.bf16.mxu0 0
    %3104 = vmatpush1.bf16.msra.mxu0 0
    %3105 = vmatprep.mubr.bf16.mxu0 0
    %3106 = vmatmul.mubr.bf16.gmra.mrb[0].mxu0 %v3071
    %v3107 = vpop.f32.mrb[0].mxu0
    %v3108 = vadd.f32 0.0, %v3107
    %v3109 = vpop.f32.mrb[0].mxu0
    %v3110 = vadd.f32 0.0, %v3109
    %v3111 = vpop.f32.mrb[0].mxu0
    %v3112 = vpop.f32.mrb[0].mxu0
    %3113 = vdwg.mxu0
    %v3116 = vcombine.low %v3108, %v3110
    %v3118 = vunpack.c.l.s4 1983009808
    %v3119 = vunpack.c.0.s8 %v3118
    %v3120 = vlaneseq
    %v3121 = vshrl.u32 %v3120, 7
    %v3122 = vsub.s32 %v3119, %v3121
    %v3123 = vrot.slane %v3116, %v3122
    %3125 = vst [vmem:[#allocation2] sm:$0xf] %v3123
    // Predicated region
    $region26: #{gcn_pooling_forward.1} parent=1 // pred_check
      _
    $region27: #{gcn_pooling_forward.1} parent=1 // pred_check_branch
      %3127 = sbr.rel (0) target = $region29
    $region28: #{gcn_pooling_forward.1} parent=1 // pred_region
      %s3129 = ssub.s32 64, 64
      %3130 = vsyncadd [#allocation3], %s3129
      %s3132 = sshll.u32 [#allocation2], 4
      %s3133 = int_to_ptr.vmem [resolvable:$true] %s3132
      %3135 = dma.vmem_to_hbm [thread:$0]  %s3133, 64, %s6, [#allocation3]
    $region29: #{gcn_pooling_forward.1} parent=1 // pred_fallthru
      _
    // Predicated region
    $region30: #{gcn_pooling_forward.1} parent=1 // pred_check
      _
    $region31: #{gcn_pooling_forward.1} parent=1 // pred_check_branch
      %3137 = sbr.rel (0) target = $region33
    $region32: #{gcn_pooling_forward.1} parent=1 // pred_region
      %3138 = dma.done [#allocation3], 64
    $region33: #{gcn_pooling_forward.1} parent=1 // pred_fallthru
      _
    %3139 = vsyncpa [#allocation3], 1

</llo_original>
